<compile_context>
chip_gen: v7x
topology: tpu7x:2x2x1
jax: 0.10.0
libtpu: 0.0.40
codegen_flags: <defaults>
</compile_context>

<pallas_src>
import functools

import jax
import jax.numpy as jnp
from jax.experimental import pallas as pl
from jax.experimental.pallas import tpu as pltpu


def _make_loss_kernel(n_classes: int):
    inv_ncls = 1.0 / float(n_classes)

    def loss_kernel(z_ref, wg_ref, bg_ref, xgt_ref, wc_ref,
                    vec_loss_ref, loss_l2_ref):
        # --- netG (synthetic): linear z -> 3*R*R, clamp to [0, 1] ------------
        # bf16 operands into the MXU, f32 accumulate.
        gen = jnp.dot(z_ref[...].astype(jnp.bfloat16), wg_ref[...],
                      preferred_element_type=jnp.float32)
        gen = gen + bg_ref[...]                       # bg kept in f32
        gen = jnp.clip(gen, 0.0, 1.0)                 # torch.clamp(gen, 0, 1)

        # --- ground-truth clamp (f32 elementwise) ----------------------------
        xgt = jnp.clip(xgt_ref[...], 0.0, 1.0)        # torch.clamp(x_gt, 0, 1)

        # --- loss_l2 = mean((y - x)**2, dim=[1,2,3]) --------------------------
        d = xgt - gen                                 # f32 difference
        l2 = jnp.mean(d * d, axis=1)                  # (TB,)
        loss_l2_ref[...] = l2.reshape(1, l2.shape[0])  # lane-dense (1, TB)

        # --- vec_loss = mean((netC(gen) - netC(x_gt))**2, dim=[1]) ------------
        # netC is linear, so netC(gen) - netC(xgt) == -(d @ Wc); bc cancels and
        # the sign vanishes under the square -> one matmul instead of two.
        cd = jnp.dot(d.astype(jnp.bfloat16), wc_ref[...],
                     preferred_element_type=jnp.float32)   # (TB, NCLS_PAD)
        # Wc is zero-padded to NCLS_PAD lanes: padded columns contribute 0 to
        # the squared sum, so divide by the true class count explicitly.
        vec = jnp.sum(cd * cd, axis=1) * inv_ncls     # (TB,)
        vec_loss_ref[...] = vec.reshape(1, vec.shape[0])

    return loss_kernel


@functools.partial(jax.jit, static_argnames=("tb",))
def loss_forward(z, x_gt_ch3, wg, bg, wc, bc, *, tb=128):
    """Returns (vec_loss, loss_l2).  The PyTorch forward returns vec_loss.

    `bc` (the netC bias) is accepted for API parity but is mathematically
    irrelevant: it cancels inside (netC(gen) - netC(x_gt)).
    """
    del bc  # cancels exactly in the vec_loss difference
    B = x_gt_ch3.shape[0]
    feat = x_gt_ch3.shape[1] * x_gt_ch3.shape[2] * x_gt_ch3.shape[3]
    zdim = z.shape[1]
    ncls = wc.shape[1]

    xgt = x_gt_ch3.reshape(B, feat).astype(jnp.float32)   # .float()
    z = z.astype(jnp.float32)

    # Pad the batch up to a multiple of the tile size (padded rows are junk
    # and sliced off below).
    num_blocks = pl.cdiv(B, tb)
    b_pad = num_blocks * tb
    if b_pad != B:
        xgt = jnp.pad(xgt, ((0, b_pad - B), (0, 0)))
        z = jnp.pad(z, ((0, b_pad - B), (0, 0)))

    # Weights: bf16 for the MXU; Wc zero-padded to a full 128-lane output tile.
    ncls_pad = max(128, 128 * pl.cdiv(ncls, 128))
    wg_bf = wg.astype(jnp.bfloat16)
    wc_bf = jnp.zeros((feat, ncls_pad), jnp.bfloat16).at[:, :ncls].set(
        wc.astype(jnp.bfloat16))
    bg_f32 = bg.astype(jnp.float32).reshape(1, feat)

    kernel = _make_loss_kernel(ncls)

    flops = 2 * b_pad * feat * (zdim + ncls_pad) + 8 * b_pad * feat
    bytes_accessed = (z.size + xgt.size + bg_f32.size) * 4 \
        + (wg_bf.size + wc_bf.size) * 2 + 2 * b_pad * 4

    vec_loss, loss_l2 = pl.pallas_call(
        kernel,
        out_shape=(
            jax.ShapeDtypeStruct((1, b_pad), jnp.float32),   # vec_loss
            jax.ShapeDtypeStruct((1, b_pad), jnp.float32),   # loss_l2 (side output)
        ),
        grid=(num_blocks,),
        in_specs=[
            pl.BlockSpec((tb, zdim), lambda i: (i, 0)),        # z tile
            pl.BlockSpec((zdim, feat), lambda i: (0, 0)),      # wg (resident)
            pl.BlockSpec((1, feat), lambda i: (0, 0)),         # bg (resident)
            pl.BlockSpec((tb, feat), lambda i: (i, 0)),        # x_gt tile
            pl.BlockSpec((feat, ncls_pad), lambda i: (0, 0)),  # wc (resident)
        ],
        out_specs=(
            pl.BlockSpec((1, tb), lambda i: (0, i)),           # lane-dense
            pl.BlockSpec((1, tb), lambda i: (0, i)),
        ),
        compiler_params=pltpu.CompilerParams(
            dimension_semantics=("parallel",)),
        cost_estimate=pl.CostEstimate(
            flops=flops, transcendentals=0, bytes_accessed=bytes_accessed),
    )(z, wg_bf, bg_f32, xgt, wc_bf)

    return vec_loss[0, :B], loss_l2[0, :B]


def _reference(z, x_gt_ch3, wg, bg, wc, bc):
    """Plain-JAX f32 reference of the same forward (for a sanity check)."""
    B = x_gt_ch3.shape[0]
    feat = x_gt_ch3.shape[1] * x_gt_ch3.shape[2] * x_gt_ch3.shape[3]
    xgt = jnp.clip(x_gt_ch3.reshape(B, feat).astype(jnp.float32), 0.0, 1.0)
    gen = jnp.clip(z.astype(jnp.float32) @ wg + bg, 0.0, 1.0)
    loss_l2 = jnp.mean((xgt - gen) ** 2, axis=1)
    c_gen = gen @ wc + bc
    c_gt = xgt @ wc + bc
    vec_loss = jnp.mean((c_gen - c_gt) ** 2, axis=1)
    return vec_loss, loss_l2


if __name__ == "__main__":
    # Small shapes consistent with the module's forward (R = args.resolution).
    B, ZDIM, R, NCLS = 256, 32, 16, 10
    FEAT = 3 * R * R

    key = jax.random.PRNGKey(0)
    k1, k2, k3, k4, k5, k6 = jax.random.split(key, 6)

    # Inputs
    z = jax.random.normal(k1, (B, ZDIM), jnp.float32)
    x_gt_ch3 = jax.random.uniform(k2, (B, 3, R, R), jnp.float32,
                                  minval=-0.2, maxval=1.2)  # exercises the clamp

    # Deterministic synthetic parameters for netG / netC
    wg = jax.random.normal(k3, (ZDIM, FEAT), jnp.float32) * 0.05
    bg = jax.random.normal(k4, (1, FEAT), jnp.float32) * 0.05 + 0.5
    wc = jax.random.normal(k5, (FEAT, NCLS), jnp.float32) * 0.02
    bc = jax.random.normal(k6, (1, NCLS), jnp.float32) * 0.02

    vec_loss, loss_l2 = loss_forward(z, x_gt_ch3, wg, bg, wc, bc)
    jax.block_until_ready(vec_loss)
    jax.block_until_ready(loss_l2)
    assert vec_loss.shape == (B,) and loss_l2.shape == (B,)

    # Loose tolerance: kernel uses bf16 MXU operands, reference is pure f32.
    vec_ref, l2_ref = _reference(z, x_gt_ch3, wg, bg, wc, bc)
    assert jnp.allclose(vec_loss, vec_ref, rtol=0.1, atol=1e-4)
    assert jnp.allclose(loss_l2, l2_ref, rtol=0.05, atol=1e-4)

    print("KERNEL_OK")
</pallas_src>

<mosaic_0001>
module attributes {stable_mosaic.version = 11 : i64} {
  func.func @loss_kernel(%arg0: i32, %arg1: memref<128x32xf32, #tpu.memory_space<vmem>>, %arg2: memref<32x768xbf16, #tpu.memory_space<vmem>>, %arg3: memref<1x768xf32, #tpu.memory_space<vmem>>, %arg4: memref<128x768xf32, #tpu.memory_space<vmem>>, %arg5: memref<768x128xbf16, #tpu.memory_space<vmem>>, %arg6: memref<1x128xf32, #tpu.memory_space<vmem>>, %arg7: memref<1x128xf32, #tpu.memory_space<vmem>>) attributes {dimension_semantics = [#tpu.dimension_semantics<parallel>], iteration_bounds = array<i64: 2>, scalar_prefetch = 0 : i64, scratch_operands = 0 : i64, tpu.core_type = #tpu.core_type<tc>, window_params = [{transform_indices = @transform_0, window_bounds = array<i64: 128, 32>}, {pipeline_mode = #tpu.pipeline_mode<synchronous>, transform_indices = @transform_1, window_bounds = array<i64: 32, 768>}, {pipeline_mode = #tpu.pipeline_mode<synchronous>, transform_indices = @transform_2, window_bounds = array<i64: 1, 768>}, {transform_indices = @transform_3, window_bounds = array<i64: 128, 768>}, {pipeline_mode = #tpu.pipeline_mode<synchronous>, transform_indices = @transform_4, window_bounds = array<i64: 768, 128>}, {transform_indices = @transform_5, window_bounds = array<i64: 1, 128>}, {transform_indices = @transform_6, window_bounds = array<i64: 1, 128>}]} {
    %c0 = arith.constant 0 : index
    %c0_0 = arith.constant 0 : index
    %0 = vector.load %arg1[%c0, %c0_0] : memref<128x32xf32, #tpu.memory_space<vmem>>, vector<128x32xf32>
    %1 = arith.truncf %0 : vector<128x32xf32> to vector<128x32xbf16>
    %c0_1 = arith.constant 0 : index
    %c0_2 = arith.constant 0 : index
    %2 = vector.load %arg2[%c0_1, %c0_2] : memref<32x768xbf16, #tpu.memory_space<vmem>>, vector<32x768xbf16>
    %cst = arith.constant dense<0.000000e+00> : vector<128x768xf32>
    %3 = tpu.matmul %1, %2, %cst {dimension_numbers = #tpu.dot_dimension_numbers<[1], [0], [0], [1], [0, 0, 1, 1], [], []>} : vector<128x32xbf16>, vector<32x768xbf16>, vector<128x768xf32> -> vector<128x768xf32>
    %c0_3 = arith.constant 0 : index
    %c0_4 = arith.constant 0 : index
    %4 = vector.load %arg3[%c0_3, %c0_4] : memref<1x768xf32, #tpu.memory_space<vmem>>, vector<1x768xf32>
    %5 = vector.broadcast %4 : vector<1x768xf32> to vector<128x768xf32>
    %6 = arith.addf %3, %5 : vector<128x768xf32>
    %cst_5 = arith.constant 0.000000e+00 : f32
    %cst_6 = arith.constant 1.000000e+00 : f32
    %7 = vector.broadcast %cst_5 : f32 to vector<128x768xf32>
    %8 = arith.maximumf %7, %6 : vector<128x768xf32>
    %9 = vector.broadcast %cst_6 : f32 to vector<128x768xf32>
    %10 = arith.minimumf %9, %8 : vector<128x768xf32>
    %c0_7 = arith.constant 0 : index
    %c0_8 = arith.constant 0 : index
    %11 = vector.load %arg4[%c0_7, %c0_8] : memref<128x768xf32, #tpu.memory_space<vmem>>, vector<128x768xf32>
    %cst_9 = arith.constant 0.000000e+00 : f32
    %cst_10 = arith.constant 1.000000e+00 : f32
    %12 = vector.broadcast %cst_9 : f32 to vector<128x768xf32>
    %13 = arith.maximumf %12, %11 : vector<128x768xf32>
    %14 = vector.broadcast %cst_10 : f32 to vector<128x768xf32>
    %15 = arith.minimumf %14, %13 : vector<128x768xf32>
    %16 = arith.subf %15, %10 : vector<128x768xf32>
    %17 = arith.mulf %16, %16 : vector<128x768xf32>
    %cst_11 = arith.constant dense<0.000000e+00> : vector<128xf32>
    %18 = vector.multi_reduction <add>, %17, %cst_11 [1] : vector<128x768xf32> to vector<128xf32>
    %cst_12 = arith.constant 7.680000e+02 : f32
    %19 = vector.broadcast %cst_12 : f32 to vector<128xf32>
    %20 = arith.divf %18, %19 : vector<128xf32>
    %21 = vector.shape_cast %20 : vector<128xf32> to vector<1x128xf32>
    %c0_13 = arith.constant 0 : index
    %c0_14 = arith.constant 0 : index
    %22 = vector.load %arg7[%c0_13, %c0_14] : memref<1x128xf32, #tpu.memory_space<vmem>>, vector<1x128xf32>
    tpu.vector_store %arg7[%c0_13, %c0_14], %21 {strides = array<i32>} : memref<1x128xf32, #tpu.memory_space<vmem>>, vector<1x128xf32>,
    %23 = arith.truncf %16 : vector<128x768xf32> to vector<128x768xbf16>
    %c0_15 = arith.constant 0 : index
    %c0_16 = arith.constant 0 : index
    %24 = vector.load %arg5[%c0_15, %c0_16] : memref<768x128xbf16, #tpu.memory_space<vmem>>, vector<768x128xbf16>
    %cst_17 = arith.constant dense<0.000000e+00> : vector<128x128xf32>
    %25 = tpu.matmul %23, %24, %cst_17 {dimension_numbers = #tpu.dot_dimension_numbers<[1], [0], [0], [1], [0, 0, 1, 1], [], []>} : vector<128x768xbf16>, vector<768x128xbf16>, vector<128x128xf32> -> vector<128x128xf32>
    %26 = arith.mulf %25, %25 : vector<128x128xf32>
    %cst_18 = arith.constant dense<0.000000e+00> : vector<128xf32>
    %27 = vector.multi_reduction <add>, %26, %cst_18 [1] : vector<128x128xf32> to vector<128xf32>
    %cst_19 = arith.constant 1.000000e-01 : f32
    %28 = vector.broadcast %cst_19 : f32 to vector<128xf32>
    %29 = arith.mulf %27, %28 : vector<128xf32>
    %30 = vector.shape_cast %29 : vector<128xf32> to vector<1x128xf32>
    %c0_20 = arith.constant 0 : index
    %c0_21 = arith.constant 0 : index
    %31 = vector.load %arg6[%c0_20, %c0_21] : memref<1x128xf32, #tpu.memory_space<vmem>>, vector<1x128xf32>
    tpu.vector_store %arg6[%c0_20, %c0_21], %30 {strides = array<i32>} : memref<1x128xf32, #tpu.memory_space<vmem>>, vector<1x128xf32>,
    return
  }
  func.func @transform_0(%arg0: i32) -> (i32, i32) {
    %c0_i32 = arith.constant 0 : i32
    %c0_i32_0 = arith.constant 0 : i32
    return %arg0, %c0_i32 : i32, i32
  }
  func.func @transform_1(%arg0: i32) -> (i32, i32) {
    %c0_i32 = arith.constant 0 : i32
    %c0_i32_0 = arith.constant 0 : i32
    %c0_i32_1 = arith.constant 0 : i32
    return %c0_i32, %c0_i32_0 : i32, i32
  }
  func.func @transform_2(%arg0: i32) -> (i32, i32) {
    %c0_i32 = arith.constant 0 : i32
    %c0_i32_0 = arith.constant 0 : i32
    %c0_i32_1 = arith.constant 0 : i32
    return %c0_i32, %c0_i32_0 : i32, i32
  }
  func.func @transform_3(%arg0: i32) -> (i32, i32) {
    %c0_i32 = arith.constant 0 : i32
    %c0_i32_0 = arith.constant 0 : i32
    return %arg0, %c0_i32 : i32, i32
  }
  func.func @transform_4(%arg0: i32) -> (i32, i32) {
    %c0_i32 = arith.constant 0 : i32
    %c0_i32_0 = arith.constant 0 : i32
    %c0_i32_1 = arith.constant 0 : i32
    return %c0_i32, %c0_i32_0 : i32, i32
  }
  func.func @transform_5(%arg0: i32) -> (i32, i32) {
    %c0_i32 = arith.constant 0 : i32
    %c0_i32_0 = arith.constant 0 : i32
    return %c0_i32, %arg0 : i32, i32
  }
  func.func @transform_6(%arg0: i32) -> (i32, i32) {
    %c0_i32 = arith.constant 0 : i32
    %c0_i32_0 = arith.constant 0 : i32
    return %c0_i32, %arg0 : i32, i32
  }
}

</mosaic_0001>

<llo_original>
// kernel: loss_forward.1
$region0: #{loss_forward.1}
  #allocation0 [shape = 'u32[]', space=smem, size = 0x4, offset = 0x4, fixed_abs, tag = 'smem constant byte address 0x4 - core index']
  #allocation1 [shape = 'u32[144,128]{1,0:T(1,128)}', space=vmem, size = 0x12000, scoped, tag = 'internal scratch']
  %s0 = inlined_call_operand.vmem [shape: f32[256,32], index: 0, kind: input, shape index: {}]
  %s1 = inlined_call_operand.vmem [shape: bf16[32,768], index: 1, kind: input, shape index: {}]
  %s2 = inlined_call_operand.vmem [shape: f32[1,768], index: 2, kind: input, shape index: {}]
  %s3 = inlined_call_operand.vmem [shape: f32[256,768], index: 3, kind: input, shape index: {}]
  %s4 = inlined_call_operand.vmem [shape: bf16[768,128], index: 4, kind: input, shape index: {}]
  %s5 = inlined_call_operand.hbm [shape: f32[1,256], index: 5, kind: output, shape index: {0}]
  %s6 = inlined_call_operand.hbm [shape: f32[1,256], index: 6, kind: output, shape index: {1}]
  %7 = xla_tuple %s5, %s6
  %s8 = sld [smem:[#allocation0]]
  $region61: #{loss_forward.1} parent=0
    _
  %s10 = ssub.s32 1, %s8
  %s11 = scalar_select 0, %s10, %s8
  $region1: #{loss_forward.1} parent=0
    #allocation2 [shape = 'u8[1024]{0}', space=vmem, size = 0x400, scoped, tag = 'output window, operand 0']
    #allocation3 [shape = 's32[2]{0}', space=sflag, size = 0x8, scoped, tag = 'scoped memory for loss_forward.1']
    #allocation4 [shape = 'u8[1024]{0}', space=vmem, size = 0x400, scoped, tag = 'output window, operand 1']
    #allocation5 [shape = 's32[2]{0}', space=sflag, size = 0x8, scoped, tag = 'scoped memory for loss_forward.1']
    %12 = vsyncpa [#allocation3], 0
    %s13 = scalar_lea.sflag [#allocation3], 1
    %14 = vsyncpa %s13, 0
    %15 = vsyncpa [#allocation5], 0
    %s16 = scalar_lea.sflag [#allocation5], 1
    %17 = vsyncpa %s16, 0
    loop: start=0, step=1, limit=4
    $region2: #{loss_forward.1} parent=1 // loop_pre_header
      _
    $region3: #{loss_forward.1} parent=1 // loop_header
      %s19 = sphi 0, %s23
      %p20 = scmp.ge.s32.totalorder %s19, 4
      %s29 = sphi 0, %s31
      %s32 = sphi 0, %s29
      %s33 = sphi 0, %s32
      %s49 = sphi 0, %s33
      %s53 = sphi 0, %s53
      %s55 = sphi 0, %s53
      %s56 = sphi 0, %s55
      %s70 = sphi 0, %s56
      %s74 = sphi 0, %s74
      %s76 = sphi 0, %s74
      %s77 = sphi 0, %s76
      %s91 = sphi 0, %s77
      %s97 = sphi 0, %s99
      %s100 = sphi 0, %s97
      %s101 = sphi 0, %s100
      %s117 = sphi 0, %s101
      %s121 = sphi 0, %s121
      %s123 = sphi 0, %s121
      %s124 = sphi 0, %s123
      %s138 = sphi 0, %s124
      %s144 = sphi 0, %s146
      %s147 = sphi 0, %s144
      %s148 = sphi 0, %s147
      %s164 = sphi 0, %s148
      %s170 = sphi 0, %s172
      %s173 = sphi 0, %s170
      %s174 = sphi 0, %s173
      %s190 = sphi 0, %s174
    $region4: #{loss_forward.1} parent=1 // loop_header_branch
      %22 = sbr.rel (%p20) target = $region8
    $region5: #{loss_forward.1} parent=1 // loop_body
      %s24 = ssub.s32 %s19, 1
      %s25 = ssub.s32 %s19, 2
      %s26 = sadd.s32 %s19, 1
      %s27 = ssub.s32 %s19, %s26
      %p28 = scmp.eq.s32.totalorder %s27, 0
      %s30 = sadd.s32 %s29, 1
      %s31 = scalar_select %p28, %s29, %s30
      %p34 = pneg %p28
      %p35 = scmp.eq.s32.totalorder %s19, 1
      %p36 = por %p34, %p35
      %p37 = scmp.ne.s32.totalorder %s29, %s32
      %p38 = scmp.eq.s32.totalorder %s19, 0
      %p39 = por %p37, %p38
      %p40 = scmp.ne.s32.totalorder %s29, %s32
      %p41 = scmp.eq.s32.totalorder %s24, 1
      %p42 = por %p40, %p41
      %p43 = scmp.ne.s32.totalorder %s32, %s33
      %p44 = scmp.eq.s32.totalorder %s24, 0
      %p45 = por %p43, %p44
      %p46 = scmp.ne.s32.totalorder %s32, %s33
      %p47 = scmp.eq.s32.totalorder %s25, 1
      %p48 = por %p46, %p47
      %p50 = scmp.ne.s32.totalorder %s33, %s49
      %p51 = scmp.eq.s32.totalorder %s25, 0
      %p52 = por %p50, %p51
      %s54 = sadd.s32 %s53, 1
      %p57 = scmp.eq.s32.totalorder %s19, 1
      %p58 = scmp.ne.s32.totalorder %s53, %s55
      %p59 = scmp.eq.s32.totalorder %s19, 0
      %p60 = por %p58, %p59
      %p61 = scmp.ne.s32.totalorder %s53, %s55
      %p62 = scmp.eq.s32.totalorder %s24, 1
      %p63 = por %p61, %p62
      %p64 = scmp.ne.s32.totalorder %s55, %s56
      %p65 = scmp.eq.s32.totalorder %s24, 0
      %p66 = por %p64, %p65
      %p67 = scmp.ne.s32.totalorder %s55, %s56
      %p68 = scmp.eq.s32.totalorder %s25, 1
      %p69 = por %p67, %p68
      %p71 = scmp.ne.s32.totalorder %s56, %s70
      %p72 = scmp.eq.s32.totalorder %s25, 0
      %p73 = por %p71, %p72
      %s75 = sadd.s32 %s74, 1
      %p78 = scmp.eq.s32.totalorder %s19, 1
      %p79 = scmp.ne.s32.totalorder %s74, %s76
      %p80 = scmp.eq.s32.totalorder %s19, 0
      %p81 = por %p79, %p80
      %p82 = scmp.ne.s32.totalorder %s74, %s76
      %p83 = scmp.eq.s32.totalorder %s24, 1
      %p84 = por %p82, %p83
      %p85 = scmp.ne.s32.totalorder %s76, %s77
      %p86 = scmp.eq.s32.totalorder %s24, 0
      %p87 = por %p85, %p86
      %p88 = scmp.ne.s32.totalorder %s76, %s77
      %p89 = scmp.eq.s32.totalorder %s25, 1
      %p90 = por %p88, %p89
      %p92 = scmp.ne.s32.totalorder %s77, %s91
      %p93 = scmp.eq.s32.totalorder %s25, 0
      %p94 = por %p92, %p93
      %s95 = ssub.s32 %s19, %s26
      %p96 = scmp.eq.s32.totalorder %s95, 0
      %s98 = sadd.s32 %s97, 1
      %s99 = scalar_select %p96, %s97, %s98
      %p102 = pneg %p96
      %p103 = scmp.eq.s32.totalorder %s19, 1
      %p104 = por %p102, %p103
      %p105 = scmp.ne.s32.totalorder %s97, %s100
      %p106 = scmp.eq.s32.totalorder %s19, 0
      %p107 = por %p105, %p106
      %p108 = scmp.ne.s32.totalorder %s97, %s100
      %p109 = scmp.eq.s32.totalorder %s24, 1
      %p110 = por %p108, %p109
      %p111 = scmp.ne.s32.totalorder %s100, %s101
      %p112 = scmp.eq.s32.totalorder %s24, 0
      %p113 = por %p111, %p112
      %p114 = scmp.ne.s32.totalorder %s100, %s101
      %p115 = scmp.eq.s32.totalorder %s25, 1
      %p116 = por %p114, %p115
      %p118 = scmp.ne.s32.totalorder %s101, %s117
      %p119 = scmp.eq.s32.totalorder %s25, 0
      %p120 = por %p118, %p119
      %s122 = sadd.s32 %s121, 1
      %p125 = scmp.eq.s32.totalorder %s19, 1
      %p126 = scmp.ne.s32.totalorder %s121, %s123
      %p127 = scmp.eq.s32.totalorder %s19, 0
      %p128 = por %p126, %p127
      %p129 = scmp.ne.s32.totalorder %s121, %s123
      %p130 = scmp.eq.s32.totalorder %s24, 1
      %p131 = por %p129, %p130
      %p132 = scmp.ne.s32.totalorder %s123, %s124
      %p133 = scmp.eq.s32.totalorder %s24, 0
      %p134 = por %p132, %p133
      %p135 = scmp.ne.s32.totalorder %s123, %s124
      %p136 = scmp.eq.s32.totalorder %s25, 1
      %p137 = por %p135, %p136
      %p139 = scmp.ne.s32.totalorder %s124, %s138
      %p140 = scmp.eq.s32.totalorder %s25, 0
      %p141 = por %p139, %p140
      %s142 = ssub.s32 %s19, %s26
      %p143 = scmp.eq.s32.totalorder %s142, 0
      %s145 = sadd.s32 %s144, 1
      %s146 = scalar_select %p143, %s144, %s145
      %p149 = pneg %p143
      %p150 = scmp.eq.s32.totalorder %s19, 1
      %p151 = por %p149, %p150
      %p152 = scmp.ne.s32.totalorder %s144, %s147
      %p153 = scmp.eq.s32.totalorder %s19, 0
      %p154 = por %p152, %p153
      %p155 = scmp.ne.s32.totalorder %s144, %s147
      %p156 = scmp.eq.s32.totalorder %s24, 1
      %p157 = por %p155, %p156
      %p158 = scmp.ne.s32.totalorder %s147, %s148
      %p159 = scmp.eq.s32.totalorder %s24, 0
      %p160 = por %p158, %p159
      %p161 = scmp.ne.s32.totalorder %s147, %s148
      %p162 = scmp.eq.s32.totalorder %s25, 1
      %p163 = por %p161, %p162
      %p165 = scmp.ne.s32.totalorder %s148, %s164
      %p166 = scmp.eq.s32.totalorder %s25, 0
      %p167 = por %p165, %p166
      %s168 = ssub.s32 %s19, %s26
      %p169 = scmp.eq.s32.totalorder %s168, 0
      %s171 = sadd.s32 %s170, 1
      %s172 = scalar_select %p169, %s170, %s171
      %p175 = pneg %p169
      %p176 = scmp.eq.s32.totalorder %s19, 1
      %p177 = por %p175, %p176
      %p178 = scmp.ne.s32.totalorder %s170, %s173
      %p179 = scmp.eq.s32.totalorder %s19, 0
      %p180 = por %p178, %p179
      %p181 = scmp.ne.s32.totalorder %s170, %s173
      %p182 = scmp.eq.s32.totalorder %s24, 1
      %p183 = por %p181, %p182
      %p184 = scmp.ne.s32.totalorder %s173, %s174
      %p185 = scmp.eq.s32.totalorder %s24, 0
      %p186 = por %p184, %p185
      %p187 = scmp.ne.s32.totalorder %s173, %s174
      %p188 = scmp.eq.s32.totalorder %s25, 1
      %p189 = por %p187, %p188
      %p191 = scmp.ne.s32.totalorder %s174, %s190
      %p192 = scmp.eq.s32.totalorder %s25, 0
      %p193 = por %p191, %p192
      %p194 = scmp.le.s32.totalorder 1, %s19
      %p195 = scmp.lt.s32.totalorder %s19, 3
      %p196 = pnand %p194, %p195
      %p197 = pneg %p196
      // Predicated region
      $region9: #{loss_forward.1} parent=5 // pred_check
        _
      $region10: #{loss_forward.1} parent=5 // pred_check_branch
        %199 = sbr.rel (%p196) target = $region12
      $region11: #{loss_forward.1} parent=5 // pred_region
        %s200 = ssub.s32 %s19, 1
        // Predicated region
        $region13: #{loss_forward.1} parent=11 // pred_check
          %p201 = pneg %p66
        $region14: #{loss_forward.1} parent=11 // pred_check_branch
          %203 = sbr.rel (%p201) target = $region16
        $region15: #{loss_forward.1} parent=11 // pred_region
          _
        $region16: #{loss_forward.1} parent=11 // pred_fallthru
          _
        // Predicated region
        $region17: #{loss_forward.1} parent=11 // pred_check
          %p204 = pneg %p87
        $region18: #{loss_forward.1} parent=11 // pred_check_branch
          %206 = sbr.rel (%p204) target = $region20
        $region19: #{loss_forward.1} parent=11 // pred_region
          _
        $region20: #{loss_forward.1} parent=11 // pred_fallthru
          _
        // Predicated region
        $region21: #{loss_forward.1} parent=11 // pred_check
          %p207 = pneg %p134
        $region22: #{loss_forward.1} parent=11 // pred_check_branch
          %209 = sbr.rel (%p207) target = $region24
        $region23: #{loss_forward.1} parent=11 // pred_region
          _
        $region24: #{loss_forward.1} parent=11 // pred_fallthru
          _
      $region12: #{loss_forward.1} parent=5 // pred_fallthru
        _
      %p210 = scmp.lt.s32.totalorder %s19, 2
      // Predicated region
      $region25: #{loss_forward.1} parent=5 // pred_check
        %p211 = pneg %p210
      $region26: #{loss_forward.1} parent=5 // pred_check_branch
        %213 = sbr.rel (%p211) target = $region28
      $region27: #{loss_forward.1} parent=5 // pred_region
        // Predicated region
        $region29: #{loss_forward.1} parent=27 // pred_check
          %p214 = pneg %p39
        $region30: #{loss_forward.1} parent=27 // pred_check_branch
          %216 = sbr.rel (%p214) target = $region32
        $region31: #{loss_forward.1} parent=27 // pred_region
          %s217 = smul.u32 16, %s19
          %p218 = scmp.lt.s32.totalorder %s217, 31
          %s219 = scalar_select %p218, %s217, 31
          %s220 = smul.addr %s219, 8
          %s221 = scalar_lea.vmem %s0, %s220
          %s222 = smul.u32 16, %s19
        $region32: #{loss_forward.1} parent=27 // pred_fallthru
          _
        // Predicated region
        $region33: #{loss_forward.1} parent=27 // pred_check
          %p223 = pneg %p107
        $region34: #{loss_forward.1} parent=27 // pred_check_branch
          %225 = sbr.rel (%p223) target = $region36
        $region35: #{loss_forward.1} parent=27 // pred_region
          %s226 = smul.u32 16, %s19
          %p227 = scmp.lt.s32.totalorder %s226, 31
          %s228 = scalar_select %p227, %s226, 31
          %s229 = smul.addr %s228, 6
          %s230 = smul.addr %s229, 8
          %s231 = scalar_lea.vmem %s3, %s230
          %s232 = smul.u32 16, %s19
        $region36: #{loss_forward.1} parent=27 // pred_fallthru
          _
      $region28: #{loss_forward.1} parent=5 // pred_fallthru
        _
      %p233 = scmp.le.s32.totalorder 1, %s19
      %p234 = scmp.lt.s32.totalorder %s19, 3
      %p235 = pnand %p233, %p234
      %p236 = pneg %p235
      // Predicated region
      $region37: #{loss_forward.1} parent=5 // pred_check
        _
      $region38: #{loss_forward.1} parent=5 // pred_check_branch
        %238 = sbr.rel (%p235) target = $region40
      $region39: #{loss_forward.1} parent=5 // pred_region
        %s239 = ssub.s32 %s19, 1
        %s240 = smul.u32 16, %s24
        %p241 = scmp.lt.s32.totalorder %s240, 31
        %s242 = scalar_select %p241, %s240, 31
        %s243 = smul.addr %s242, 8
        %s244 = scalar_lea.vmem %s0, %s243
        %p245 = pneg %p45
        %p246 = pneg %p42
        %p247 = pneg %p66
        %p248 = pneg %p63
        %p249 = pneg %p87
        %p250 = pneg %p84
        %s251 = smul.u32 16, %s24
        %p252 = scmp.lt.s32.totalorder %s251, 31
        %s253 = scalar_select %p252, %s251, 31
        %s254 = smul.addr %s253, 6
        %s255 = smul.addr %s254, 8
        %s256 = scalar_lea.vmem %s3, %s255
        %p257 = pneg %p113
        %p258 = pneg %p110
        %p259 = pneg %p134
        %p260 = pneg %p131
        %p261 = pneg %p160
        %p262 = pneg %p157
        %s263 = sand.u32 %s147, 1
        %s264 = scalar_lea.sflag [#allocation3], %s263
        %s265 = sand.u32 %s147, 1
        %s266 = scalar_lea.vmem [#allocation2], %s265
        %p267 = pneg %p186
        %p268 = pneg %p183
        %s269 = sand.u32 %s173, 1
        %s270 = scalar_lea.sflag [#allocation5], %s269
        %s271 = sand.u32 %s173, 1
        %s272 = scalar_lea.vmem [#allocation4], %s271
        %s273 = smul.u32 16, %s24
        %p274 = scmp.lt.s32.totalorder %s273, 31
        %s275 = scalar_select %p274, %s273, 31
        %s276 = smul.addr %s275, 8
        %s277 = scalar_lea.vmem %s0, %s276
        %s278 = smul.u32 16, %s24
        %s279 = smul.u32 16, %s24
        %p280 = scmp.lt.s32.totalorder %s279, 31
        %s281 = scalar_select %p280, %s279, 31
        %s282 = smul.addr %s281, 6
        %s283 = smul.addr %s282, 8
        %s284 = scalar_lea.vmem %s3, %s283
        %s285 = smul.u32 16, %s24
        %v287 = vld [vmem:[%s277] sm:$0xff]
        %v288 = vld [vmem:[%s277 + $0x8] sm:$0xff]
        %v289 = vld [vmem:[%s277 + $0x10] sm:$0xff]
        %v290 = vld [vmem:[%s277 + $0x18] sm:$0xff]
        %v291 = vld [vmem:[%s277 + $0x20] sm:$0xff]
        %v292 = vld [vmem:[%s277 + $0x28] sm:$0xff]
        %v293 = vld [vmem:[%s277 + $0x30] sm:$0xff]
        %v294 = vld [vmem:[%s277 + $0x38] sm:$0xff]
        %v295 = vld [vmem:[%s277 + $0x40] sm:$0xff]
        %v296 = vld [vmem:[%s277 + $0x48] sm:$0xff]
        %v297 = vld [vmem:[%s277 + $0x50] sm:$0xff]
        %v298 = vld [vmem:[%s277 + $0x58] sm:$0xff]
        %v299 = vld [vmem:[%s277 + $0x60] sm:$0xff]
        %v300 = vld [vmem:[%s277 + $0x68] sm:$0xff]
        %v301 = vld [vmem:[%s277 + $0x70] sm:$0xff]
        %v302 = vld [vmem:[%s277 + $0x78] sm:$0xff]
        %v303 = vpack.c.bf16 %v288, %v287
        %v304 = vpack.c.bf16 %v290, %v289
        %v305 = vpack.c.bf16 %v292, %v291
        %v306 = vpack.c.bf16 %v294, %v293
        %v307 = vpack.c.bf16 %v296, %v295
        %v308 = vpack.c.bf16 %v298, %v297
        %v309 = vpack.c.bf16 %v300, %v299
        %v310 = vpack.c.bf16 %v302, %v301
        %v311 = vld [vmem:[%s1] sm:$0xff]
        %v312 = vld [vmem:[%s1 + $0x8] sm:$0xff]
        %v313 = vld [vmem:[%s1 + $0x10] sm:$0xff]
        %v314 = vld [vmem:[%s1 + $0x18] sm:$0xff]
        %v315 = vld [vmem:[%s1 + $0x20] sm:$0xff]
        %v316 = vld [vmem:[%s1 + $0x28] sm:$0xff]
        %v317 = vld [vmem:[%s1 + $0x30] sm:$0xff]
        %v318 = vld [vmem:[%s1 + $0x38] sm:$0xff]
        %v319 = vld [vmem:[%s1 + $0x40] sm:$0xff]
        %v320 = vld [vmem:[%s1 + $0x48] sm:$0xff]
        %v321 = vld [vmem:[%s1 + $0x50] sm:$0xff]
        %v322 = vld [vmem:[%s1 + $0x58] sm:$0xff]
        %v323 = vld [vmem:[%s2] sm:$0x3f]
        %v325 = vlaneseq
        %v326 = vshrl.u32 %v325, 7
        %v327 = vsub.s32 0, %v326
        %v328 = vrot.slane %v323, %v327
        %v329 = vlaneseq
        %v330 = vshrl.u32 %v329, 7
        %v331 = vsub.s32 1, %v330
        %v332 = vrot.slane %v323, %v331
        %v333 = vlaneseq
        %v334 = vshrl.u32 %v333, 7
        %v335 = vsub.s32 2, %v334
        %v336 = vrot.slane %v323, %v335
        %v337 = vlaneseq
        %v338 = vshrl.u32 %v337, 7
        %v339 = vsub.s32 3, %v338
        %v340 = vrot.slane %v323, %v339
        %v341 = vlaneseq
        %v342 = vshrl.u32 %v341, 7
        %v343 = vsub.s32 4, %v342
        %v344 = vrot.slane %v323, %v343
        %v345 = vlaneseq
        %v346 = vshrl.u32 %v345, 7
        %v347 = vsub.s32 5, %v346
        %v348 = vrot.slane %v323, %v347
        %v367 = vunpack.c.l.b16 %v311
        %v368 = vunpack.c.h.b16 %v311
        %v369 = vunpack.c.l.b16 %v312
        %v370 = vunpack.c.h.b16 %v312
        %v371 = vunpack.c.l.b16 %v313
        %v372 = vunpack.c.h.b16 %v313
        %v373 = vunpack.c.l.b16 %v314
        %v374 = vunpack.c.h.b16 %v314
        %v375 = vunpack.c.l.b16 %v315
        %v376 = vunpack.c.h.b16 %v315
        %v377 = vunpack.c.l.b16 %v316
        %v378 = vunpack.c.h.b16 %v316
        %v379 = vunpack.c.l.b16 %v317
        %v380 = vunpack.c.h.b16 %v317
        %v381 = vunpack.c.l.b16 %v318
        %v382 = vunpack.c.h.b16 %v318
        %v383 = vunpack.c.l.b16 %v319
        %v384 = vunpack.c.h.b16 %v319
        %v385 = vunpack.c.l.b16 %v320
        %v386 = vunpack.c.h.b16 %v320
        %v387 = vunpack.c.l.b16 %v321
        %v388 = vunpack.c.h.b16 %v321
        %v389 = vunpack.c.l.b16 %v322
        %v390 = vunpack.c.h.b16 %v322
        %v391 = vpack.c.b16 %v373, %v367
        %v392 = vpack.c.b16 %v374, %v368
        %v393 = vpack.c.b16 %v375, %v369
        %v394 = vpack.c.b16 %v376, %v370
        %v395 = vpack.c.b16 %v377, %v371
        %v396 = vpack.c.b16 %v378, %v372
        %v397 = vpack.c.b16 %v385, %v379
        %v398 = vpack.c.b16 %v386, %v380
        %v399 = vpack.c.b16 %v387, %v381
        %v400 = vpack.c.b16 %v388, %v382
        %v401 = vpack.c.b16 %v389, %v383
        %v402 = vpack.c.b16 %v390, %v384
        %vm415 = vcmask 261120
        %v417 = vsel %vm415, %v303, 0
        %v420 = vsel %vm415, %v304, 0
        %v423 = vsel %vm415, %v305, 0
        %v426 = vsel %vm415, %v306, 0
        %v429 = vsel %vm415, %v307, 0
        %v432 = vsel %vm415, %v308, 0
        %v435 = vsel %vm415, %v309, 0
        %v438 = vsel %vm415, %v310, 0
        %440 = vmatprep.subr.bf16.mxu0 %v392
        %441 = vmatpush1.bf16.msra.mxu0 %v391
        %442 = vmatprep.subr.bf16.mxu0 %v398
        %443 = vmatpush1.bf16.msra.mxu0 %v397
        %444 = vmatprep.subr.bf16.mxu0 0
        %445 = vmatpush1.bf16.msra.mxu0 0
        %446 = vmatprep.subr.bf16.mxu0 0
        %447 = vmatpush1.bf16.msra.mxu0 0
        %448 = vmatprep.subr.bf16.mxu0 0
        %449 = vmatpush1.bf16.msra.mxu0 0
        %450 = vmatprep.subr.bf16.mxu0 0
        %451 = vmatpush1.bf16.msra.mxu0 0
        %452 = vmatprep.subr.bf16.mxu0 0
        %453 = vmatpush1.bf16.msra.mxu0 0
        %454 = vmatprep.subr.bf16.mxu0 0
        %455 = vmatpush1.bf16.msra.mxu0 0
        %456 = vmatprep.subr.bf16.mxu0 0
        %457 = vmatpush1.bf16.msra.mxu0 0
        %458 = vmatprep.subr.bf16.mxu0 0
        %459 = vmatpush1.bf16.msra.mxu0 0
        %460 = vmatprep.subr.bf16.mxu0 0
        %461 = vmatpush1.bf16.msra.mxu0 0
        %462 = vmatprep.subr.bf16.mxu0 0
        %463 = vmatpush1.bf16.msra.mxu0 0
        %464 = vmatprep.subr.bf16.mxu0 0
        %465 = vmatpush1.bf16.msra.mxu0 0
        %466 = vmatprep.subr.bf16.mxu0 0
        %467 = vmatpush1.bf16.msra.mxu0 0
        %468 = vmatprep.subr.bf16.mxu0 0
        %469 = vmatpush1.bf16.msra.mxu0 0
        %470 = vmatprep.subr.bf16.mxu0 0
        %471 = vmatpush1.bf16.msra.mxu0 0
        %472 = vmatprep.mubr.bf16.mxu0 0
        %473 = vmatmul.mubr.bf16.gmra.mrb[0].mxu0 %v417
        %v474 = vpop.f32.mrb[0].mxu0
        %v475 = vadd.f32 %v328, %v474
        %v476 = vpop.f32.mrb[0].mxu0
        %v477 = vadd.f32 %v332, %v476
        %v478 = vpop.f32.mrb[0].mxu0
        %v479 = vadd.f32 %v328, %v478
        %v480 = vpop.f32.mrb[0].mxu0
        %v481 = vadd.f32 %v332, %v480
        %482 = vmatprep.mubr.bf16.mxu0 0
        %483 = vmatmul.mubr.bf16.gmra.mrb[0].mxu0 %v420
        %v484 = vpop.f32.mrb[0].mxu0
        %v485 = vadd.f32 %v328, %v484
        %v486 = vpop.f32.mrb[0].mxu0
        %v487 = vadd.f32 %v332, %v486
        %v488 = vpop.f32.mrb[0].mxu0
        %v489 = vadd.f32 %v328, %v488
        %v490 = vpop.f32.mrb[0].mxu0
        %v491 = vadd.f32 %v332, %v490
        %492 = vmatprep.mubr.bf16.mxu0 0
        %493 = vmatmul.mubr.bf16.gmra.mrb[0].mxu0 %v423
        %v494 = vpop.f32.mrb[0].mxu0
        %v495 = vadd.f32 %v328, %v494
        %v496 = vpop.f32.mrb[0].mxu0
        %v497 = vadd.f32 %v332, %v496
        %v498 = vpop.f32.mrb[0].mxu0
        %v499 = vadd.f32 %v328, %v498
        %v500 = vpop.f32.mrb[0].mxu0
        %v501 = vadd.f32 %v332, %v500
        %502 = vmatprep.mubr.bf16.mxu0 0
        %503 = vmatmul.mubr.bf16.gmra.mrb[0].mxu0 %v426
        %v504 = vpop.f32.mrb[0].mxu0
        %v505 = vadd.f32 %v328, %v504
        %v506 = vpop.f32.mrb[0].mxu0
        %v507 = vadd.f32 %v332, %v506
        %v508 = vpop.f32.mrb[0].mxu0
        %v509 = vadd.f32 %v328, %v508
        %v510 = vpop.f32.mrb[0].mxu0
        %v511 = vadd.f32 %v332, %v510
        %512 = vmatprep.mubr.bf16.mxu0 0
        %513 = vmatmul.mubr.bf16.gmra.mrb[0].mxu0 %v429
        %v514 = vpop.f32.mrb[0].mxu0
        %v515 = vadd.f32 %v328, %v514
        %v516 = vpop.f32.mrb[0].mxu0
        %v517 = vadd.f32 %v332, %v516
        %v518 = vpop.f32.mrb[0].mxu0
        %v519 = vadd.f32 %v328, %v518
        %v520 = vpop.f32.mrb[0].mxu0
        %v521 = vadd.f32 %v332, %v520
        %522 = vmatprep.mubr.bf16.mxu0 0
        %523 = vmatmul.mubr.bf16.gmra.mrb[0].mxu0 %v432
        %v524 = vpop.f32.mrb[0].mxu0
        %v525 = vadd.f32 %v328, %v524
        %v526 = vpop.f32.mrb[0].mxu0
        %v527 = vadd.f32 %v332, %v526
        %v528 = vpop.f32.mrb[0].mxu0
        %v529 = vadd.f32 %v328, %v528
        %v530 = vpop.f32.mrb[0].mxu0
        %v531 = vadd.f32 %v332, %v530
        %532 = vmatprep.mubr.bf16.mxu0 0
        %533 = vmatmul.mubr.bf16.gmra.mrb[0].mxu0 %v435
        %v534 = vpop.f32.mrb[0].mxu0
        %v535 = vadd.f32 %v328, %v534
        %v536 = vpop.f32.mrb[0].mxu0
        %v537 = vadd.f32 %v332, %v536
        %v538 = vpop.f32.mrb[0].mxu0
        %v539 = vadd.f32 %v328, %v538
        %v540 = vpop.f32.mrb[0].mxu0
        %v541 = vadd.f32 %v332, %v540
        %542 = vmatprep.mubr.bf16.mxu0 0
        %543 = vmatmul.mubr.bf16.gmra.mrb[0].mxu0 %v438
        %v544 = vpop.f32.mrb[0].mxu0
        %v545 = vadd.f32 %v328, %v544
        %v546 = vpop.f32.mrb[0].mxu0
        %v547 = vadd.f32 %v332, %v546
        %v548 = vpop.f32.mrb[0].mxu0
        %v549 = vadd.f32 %v328, %v548
        %v550 = vpop.f32.mrb[0].mxu0
        %v551 = vadd.f32 %v332, %v550
        %552 = vdwg.mxu0
        %553 = vmatprep.subr.bf16.mxu0 %v394
        %554 = vmatpush1.bf16.msra.mxu0 %v393
        %555 = vmatprep.subr.bf16.mxu0 %v400
        %556 = vmatpush1.bf16.msra.mxu0 %v399
        %557 = vmatprep.subr.bf16.mxu0 0
        %558 = vmatpush1.bf16.msra.mxu0 0
        %559 = vmatprep.subr.bf16.mxu0 0
        %560 = vmatpush1.bf16.msra.mxu0 0
        %561 = vmatprep.subr.bf16.mxu0 0
        %562 = vmatpush1.bf16.msra.mxu0 0
        %563 = vmatprep.subr.bf16.mxu0 0
        %564 = vmatpush1.bf16.msra.mxu0 0
        %565 = vmatprep.subr.bf16.mxu0 0
        %566 = vmatpush1.bf16.msra.mxu0 0
        %567 = vmatprep.subr.bf16.mxu0 0
        %568 = vmatpush1.bf16.msra.mxu0 0
        %569 = vmatprep.subr.bf16.mxu0 0
        %570 = vmatpush1.bf16.msra.mxu0 0
        %571 = vmatprep.subr.bf16.mxu0 0
        %572 = vmatpush1.bf16.msra.mxu0 0
        %573 = vmatprep.subr.bf16.mxu0 0
        %574 = vmatpush1.bf16.msra.mxu0 0
        %575 = vmatprep.subr.bf16.mxu0 0
        %576 = vmatpush1.bf16.msra.mxu0 0
        %577 = vmatprep.subr.bf16.mxu0 0
        %578 = vmatpush1.bf16.msra.mxu0 0
        %579 = vmatprep.subr.bf16.mxu0 0
        %580 = vmatpush1.bf16.msra.mxu0 0
        %581 = vmatprep.subr.bf16.mxu0 0
        %582 = vmatpush1.bf16.msra.mxu0 0
        %583 = vmatprep.subr.bf16.mxu0 0
        %584 = vmatpush1.bf16.msra.mxu0 0
        %585 = vmatprep.mubr.bf16.mxu0 0
        %586 = vmatmul.mubr.bf16.gmra.mrb[0].mxu0 %v417
        %v587 = vpop.f32.mrb[0].mxu0
        %v588 = vadd.f32 %v336, %v587
        %v589 = vpop.f32.mrb[0].mxu0
        %v590 = vadd.f32 %v340, %v589
        %v591 = vpop.f32.mrb[0].mxu0
        %v592 = vadd.f32 %v336, %v591
        %v593 = vpop.f32.mrb[0].mxu0
        %v594 = vadd.f32 %v340, %v593
        %595 = vmatprep.mubr.bf16.mxu0 0
        %596 = vmatmul.mubr.bf16.gmra.mrb[0].mxu0 %v420
        %v597 = vpop.f32.mrb[0].mxu0
        %v598 = vadd.f32 %v336, %v597
        %v599 = vpop.f32.mrb[0].mxu0
        %v600 = vadd.f32 %v340, %v599
        %v601 = vpop.f32.mrb[0].mxu0
        %v602 = vadd.f32 %v336, %v601
        %v603 = vpop.f32.mrb[0].mxu0
        %v604 = vadd.f32 %v340, %v603
        %605 = vmatprep.mubr.bf16.mxu0 0
        %606 = vmatmul.mubr.bf16.gmra.mrb[0].mxu0 %v423
        %v607 = vpop.f32.mrb[0].mxu0
        %v608 = vadd.f32 %v336, %v607
        %v609 = vpop.f32.mrb[0].mxu0
        %v610 = vadd.f32 %v340, %v609
        %v611 = vpop.f32.mrb[0].mxu0
        %v612 = vadd.f32 %v336, %v611
        %v613 = vpop.f32.mrb[0].mxu0
        %v614 = vadd.f32 %v340, %v613
        %615 = vmatprep.mubr.bf16.mxu0 0
        %616 = vmatmul.mubr.bf16.gmra.mrb[0].mxu0 %v426
        %v617 = vpop.f32.mrb[0].mxu0
        %v618 = vadd.f32 %v336, %v617
        %v619 = vpop.f32.mrb[0].mxu0
        %v620 = vadd.f32 %v340, %v619
        %v621 = vpop.f32.mrb[0].mxu0
        %v622 = vadd.f32 %v336, %v621
        %v623 = vpop.f32.mrb[0].mxu0
        %v624 = vadd.f32 %v340, %v623
        %625 = vmatprep.mubr.bf16.mxu0 0
        %626 = vmatmul.mubr.bf16.gmra.mrb[0].mxu0 %v429
        %v627 = vpop.f32.mrb[0].mxu0
        %v628 = vadd.f32 %v336, %v627
        %v629 = vpop.f32.mrb[0].mxu0
        %v630 = vadd.f32 %v340, %v629
        %v631 = vpop.f32.mrb[0].mxu0
        %v632 = vadd.f32 %v336, %v631
        %v633 = vpop.f32.mrb[0].mxu0
        %v634 = vadd.f32 %v340, %v633
        %635 = vmatprep.mubr.bf16.mxu0 0
        %636 = vmatmul.mubr.bf16.gmra.mrb[0].mxu0 %v432
        %v637 = vpop.f32.mrb[0].mxu0
        %v638 = vadd.f32 %v336, %v637
        %v639 = vpop.f32.mrb[0].mxu0
        %v640 = vadd.f32 %v340, %v639
        %v641 = vpop.f32.mrb[0].mxu0
        %v642 = vadd.f32 %v336, %v641
        %v643 = vpop.f32.mrb[0].mxu0
        %v644 = vadd.f32 %v340, %v643
        %645 = vmatprep.mubr.bf16.mxu0 0
        %646 = vmatmul.mubr.bf16.gmra.mrb[0].mxu0 %v435
        %v647 = vpop.f32.mrb[0].mxu0
        %v648 = vadd.f32 %v336, %v647
        %v649 = vpop.f32.mrb[0].mxu0
        %v650 = vadd.f32 %v340, %v649
        %v651 = vpop.f32.mrb[0].mxu0
        %v652 = vadd.f32 %v336, %v651
        %v653 = vpop.f32.mrb[0].mxu0
        %v654 = vadd.f32 %v340, %v653
        %655 = vmatprep.mubr.bf16.mxu0 0
        %656 = vmatmul.mubr.bf16.gmra.mrb[0].mxu0 %v438
        %v657 = vpop.f32.mrb[0].mxu0
        %v658 = vadd.f32 %v336, %v657
        %v659 = vpop.f32.mrb[0].mxu0
        %v660 = vadd.f32 %v340, %v659
        %v661 = vpop.f32.mrb[0].mxu0
        %v662 = vadd.f32 %v336, %v661
        %v663 = vpop.f32.mrb[0].mxu0
        %v664 = vadd.f32 %v340, %v663
        %665 = vdwg.mxu0
        %666 = vmatprep.subr.bf16.mxu0 %v396
        %667 = vmatpush1.bf16.msra.mxu0 %v395
        %668 = vmatprep.subr.bf16.mxu0 %v402
        %669 = vmatpush1.bf16.msra.mxu0 %v401
        %670 = vmatprep.subr.bf16.mxu0 0
        %671 = vmatpush1.bf16.msra.mxu0 0
        %672 = vmatprep.subr.bf16.mxu0 0
        %673 = vmatpush1.bf16.msra.mxu0 0
        %674 = vmatprep.subr.bf16.mxu0 0
        %675 = vmatpush1.bf16.msra.mxu0 0
        %676 = vmatprep.subr.bf16.mxu0 0
        %677 = vmatpush1.bf16.msra.mxu0 0
        %678 = vmatprep.subr.bf16.mxu0 0
        %679 = vmatpush1.bf16.msra.mxu0 0
        %680 = vmatprep.subr.bf16.mxu0 0
        %681 = vmatpush1.bf16.msra.mxu0 0
        %682 = vmatprep.subr.bf16.mxu0 0
        %683 = vmatpush1.bf16.msra.mxu0 0
        %684 = vmatprep.subr.bf16.mxu0 0
        %685 = vmatpush1.bf16.msra.mxu0 0
        %686 = vmatprep.subr.bf16.mxu0 0
        %687 = vmatpush1.bf16.msra.mxu0 0
        %688 = vmatprep.subr.bf16.mxu0 0
        %689 = vmatpush1.bf16.msra.mxu0 0
        %690 = vmatprep.subr.bf16.mxu0 0
        %691 = vmatpush1.bf16.msra.mxu0 0
        %692 = vmatprep.subr.bf16.mxu0 0
        %693 = vmatpush1.bf16.msra.mxu0 0
        %694 = vmatprep.subr.bf16.mxu0 0
        %695 = vmatpush1.bf16.msra.mxu0 0
        %696 = vmatprep.subr.bf16.mxu0 0
        %697 = vmatpush1.bf16.msra.mxu0 0
        %698 = vmatprep.mubr.bf16.mxu0 0
        %699 = vmatmul.mubr.bf16.gmra.mrb[0].mxu0 %v417
        %v700 = vpop.f32.mrb[0].mxu0
        %v701 = vadd.f32 %v344, %v700
        %v702 = vpop.f32.mrb[0].mxu0
        %v703 = vadd.f32 %v348, %v702
        %v704 = vpop.f32.mrb[0].mxu0
        %v705 = vadd.f32 %v344, %v704
        %v706 = vpop.f32.mrb[0].mxu0
        %v707 = vadd.f32 %v348, %v706
        %708 = vmatprep.mubr.bf16.mxu0 0
        %709 = vmatmul.mubr.bf16.gmra.mrb[0].mxu0 %v420
        %v710 = vpop.f32.mrb[0].mxu0
        %v711 = vadd.f32 %v344, %v710
        %v712 = vpop.f32.mrb[0].mxu0
        %v713 = vadd.f32 %v348, %v712
        %v714 = vpop.f32.mrb[0].mxu0
        %v715 = vadd.f32 %v344, %v714
        %v716 = vpop.f32.mrb[0].mxu0
        %v717 = vadd.f32 %v348, %v716
        %718 = vmatprep.mubr.bf16.mxu0 0
        %719 = vmatmul.mubr.bf16.gmra.mrb[0].mxu0 %v423
        %v720 = vpop.f32.mrb[0].mxu0
        %v721 = vadd.f32 %v344, %v720
        %v722 = vpop.f32.mrb[0].mxu0
        %v723 = vadd.f32 %v348, %v722
        %v724 = vpop.f32.mrb[0].mxu0
        %v725 = vadd.f32 %v344, %v724
        %v726 = vpop.f32.mrb[0].mxu0
        %v727 = vadd.f32 %v348, %v726
        %728 = vmatprep.mubr.bf16.mxu0 0
        %729 = vmatmul.mubr.bf16.gmra.mrb[0].mxu0 %v426
        %v730 = vpop.f32.mrb[0].mxu0
        %v731 = vadd.f32 %v344, %v730
        %v732 = vpop.f32.mrb[0].mxu0
        %v733 = vadd.f32 %v348, %v732
        %v734 = vpop.f32.mrb[0].mxu0
        %v735 = vadd.f32 %v344, %v734
        %v736 = vpop.f32.mrb[0].mxu0
        %v737 = vadd.f32 %v348, %v736
        %738 = vmatprep.mubr.bf16.mxu0 0
        %739 = vmatmul.mubr.bf16.gmra.mrb[0].mxu0 %v429
        %v740 = vpop.f32.mrb[0].mxu0
        %v741 = vadd.f32 %v344, %v740
        %v742 = vpop.f32.mrb[0].mxu0
        %v743 = vadd.f32 %v348, %v742
        %v744 = vpop.f32.mrb[0].mxu0
        %v745 = vadd.f32 %v344, %v744
        %v746 = vpop.f32.mrb[0].mxu0
        %v747 = vadd.f32 %v348, %v746
        %748 = vmatprep.mubr.bf16.mxu0 0
        %749 = vmatmul.mubr.bf16.gmra.mrb[0].mxu0 %v432
        %v750 = vpop.f32.mrb[0].mxu0
        %v751 = vadd.f32 %v344, %v750
        %v752 = vpop.f32.mrb[0].mxu0
        %v753 = vadd.f32 %v348, %v752
        %v754 = vpop.f32.mrb[0].mxu0
        %v755 = vadd.f32 %v344, %v754
        %v756 = vpop.f32.mrb[0].mxu0
        %v757 = vadd.f32 %v348, %v756
        %758 = vmatprep.mubr.bf16.mxu0 0
        %759 = vmatmul.mubr.bf16.gmra.mrb[0].mxu0 %v435
        %v760 = vpop.f32.mrb[0].mxu0
        %v761 = vadd.f32 %v344, %v760
        %v762 = vpop.f32.mrb[0].mxu0
        %v763 = vadd.f32 %v348, %v762
        %v764 = vpop.f32.mrb[0].mxu0
        %v765 = vadd.f32 %v344, %v764
        %v766 = vpop.f32.mrb[0].mxu0
        %v767 = vadd.f32 %v348, %v766
        %768 = vmatprep.mubr.bf16.mxu0 0
        %769 = vmatmul.mubr.bf16.gmra.mrb[0].mxu0 %v438
        %v770 = vpop.f32.mrb[0].mxu0
        %v771 = vadd.f32 %v344, %v770
        %v772 = vpop.f32.mrb[0].mxu0
        %v773 = vadd.f32 %v348, %v772
        %v774 = vpop.f32.mrb[0].mxu0
        %v775 = vadd.f32 %v344, %v774
        %v776 = vpop.f32.mrb[0].mxu0
        %v777 = vadd.f32 %v348, %v776
        %778 = vdwg.mxu0
        %v779 = vmax.f32 %v475, 0.0
        %v780 = vmax.f32 %v477, 0.0
        %v781 = vmax.f32 %v588, 0.0
        %v782 = vmax.f32 %v590, 0.0
        %v783 = vmax.f32 %v701, 0.0
        %v784 = vmax.f32 %v703, 0.0
        %v785 = vmax.f32 %v479, 0.0
        %v786 = vmax.f32 %v481, 0.0
        %v787 = vmax.f32 %v592, 0.0
        %v788 = vmax.f32 %v594, 0.0
        %v789 = vmax.f32 %v705, 0.0
        %v790 = vmax.f32 %v707, 0.0
        %v791 = vmax.f32 %v485, 0.0
        %v792 = vmax.f32 %v487, 0.0
        %v793 = vmax.f32 %v598, 0.0
        %v794 = vmax.f32 %v600, 0.0
        %v795 = vmax.f32 %v711, 0.0
        %v796 = vmax.f32 %v713, 0.0
        %v797 = vmax.f32 %v489, 0.0
        %v798 = vmax.f32 %v491, 0.0
        %v799 = vmax.f32 %v602, 0.0
        %v800 = vmax.f32 %v604, 0.0
        %v801 = vmax.f32 %v715, 0.0
        %v802 = vmax.f32 %v717, 0.0
        %v803 = vmax.f32 %v495, 0.0
        %v804 = vmax.f32 %v497, 0.0
        %v805 = vmax.f32 %v608, 0.0
        %v806 = vmax.f32 %v610, 0.0
        %v807 = vmax.f32 %v721, 0.0
        %v808 = vmax.f32 %v723, 0.0
        %v809 = vmax.f32 %v499, 0.0
        %v810 = vmax.f32 %v501, 0.0
        %v811 = vmax.f32 %v612, 0.0
        %v812 = vmax.f32 %v614, 0.0
        %v813 = vmax.f32 %v725, 0.0
        %v814 = vmax.f32 %v727, 0.0
        %v815 = vmax.f32 %v505, 0.0
        %v816 = vmax.f32 %v507, 0.0
        %v817 = vmax.f32 %v618, 0.0
        %v818 = vmax.f32 %v620, 0.0
        %v819 = vmax.f32 %v731, 0.0
        %v820 = vmax.f32 %v733, 0.0
        %v821 = vmax.f32 %v509, 0.0
        %v822 = vmax.f32 %v511, 0.0
        %v823 = vmax.f32 %v622, 0.0
        %v824 = vmax.f32 %v624, 0.0
        %v825 = vmax.f32 %v735, 0.0
        %v826 = vmax.f32 %v737, 0.0
        %v827 = vmax.f32 %v515, 0.0
        %v828 = vmax.f32 %v517, 0.0
        %v829 = vmax.f32 %v628, 0.0
        %v830 = vmax.f32 %v630, 0.0
        %v831 = vmax.f32 %v741, 0.0
        %v832 = vmax.f32 %v743, 0.0
        %v833 = vmax.f32 %v519, 0.0
        %v834 = vmax.f32 %v521, 0.0
        %v835 = vmax.f32 %v632, 0.0
        %v836 = vmax.f32 %v634, 0.0
        %v837 = vmax.f32 %v745, 0.0
        %v838 = vmax.f32 %v747, 0.0
        %v839 = vmax.f32 %v525, 0.0
        %v840 = vmax.f32 %v527, 0.0
        %v841 = vmax.f32 %v638, 0.0
        %v842 = vmax.f32 %v640, 0.0
        %v843 = vmax.f32 %v751, 0.0
        %v844 = vmax.f32 %v753, 0.0
        %v845 = vmax.f32 %v529, 0.0
        %v846 = vmax.f32 %v531, 0.0
        %v847 = vmax.f32 %v642, 0.0
        %v848 = vmax.f32 %v644, 0.0
        %v849 = vmax.f32 %v755, 0.0
        %v850 = vmax.f32 %v757, 0.0
        %v851 = vmax.f32 %v535, 0.0
        %v852 = vmax.f32 %v537, 0.0
        %v853 = vmax.f32 %v648, 0.0
        %v854 = vmax.f32 %v650, 0.0
        %v855 = vmax.f32 %v761, 0.0
        %v856 = vmax.f32 %v763, 0.0
        %v857 = vmax.f32 %v539, 0.0
        %v858 = vmax.f32 %v541, 0.0
        %v859 = vmax.f32 %v652, 0.0
        %v860 = vmax.f32 %v654, 0.0
        %v861 = vmax.f32 %v765, 0.0
        %v862 = vmax.f32 %v767, 0.0
        %v863 = vmax.f32 %v545, 0.0
        %v864 = vmax.f32 %v547, 0.0
        %v865 = vmax.f32 %v658, 0.0
        %v866 = vmax.f32 %v660, 0.0
        %v867 = vmax.f32 %v771, 0.0
        %v868 = vmax.f32 %v773, 0.0
        %v869 = vmax.f32 %v549, 0.0
        %v870 = vmax.f32 %v551, 0.0
        %v871 = vmax.f32 %v662, 0.0
        %v872 = vmax.f32 %v664, 0.0
        %v873 = vmax.f32 %v775, 0.0
        %v874 = vmax.f32 %v777, 0.0
        %v875 = vmin.f32 %v779, 1.0
        %v876 = vmin.f32 %v780, 1.0
        %v877 = vmin.f32 %v781, 1.0
        %v878 = vmin.f32 %v782, 1.0
        %v879 = vmin.f32 %v783, 1.0
        %v880 = vmin.f32 %v784, 1.0
        %v881 = vmin.f32 %v785, 1.0
        %v882 = vmin.f32 %v786, 1.0
        %v883 = vmin.f32 %v787, 1.0
        %v884 = vmin.f32 %v788, 1.0
        %v885 = vmin.f32 %v789, 1.0
        %v886 = vmin.f32 %v790, 1.0
        %v887 = vmin.f32 %v791, 1.0
        %v888 = vmin.f32 %v792, 1.0
        %v889 = vmin.f32 %v793, 1.0
        %v890 = vmin.f32 %v794, 1.0
        %v891 = vmin.f32 %v795, 1.0
        %v892 = vmin.f32 %v796, 1.0
        %v893 = vmin.f32 %v797, 1.0
        %v894 = vmin.f32 %v798, 1.0
        %v895 = vmin.f32 %v799, 1.0
        %v896 = vmin.f32 %v800, 1.0
        %v897 = vmin.f32 %v801, 1.0
        %v898 = vmin.f32 %v802, 1.0
        %v899 = vmin.f32 %v803, 1.0
        %v900 = vmin.f32 %v804, 1.0
        %v901 = vmin.f32 %v805, 1.0
        %v902 = vmin.f32 %v806, 1.0
        %v903 = vmin.f32 %v807, 1.0
        %v904 = vmin.f32 %v808, 1.0
        %v905 = vmin.f32 %v809, 1.0
        %v906 = vmin.f32 %v810, 1.0
        %v907 = vmin.f32 %v811, 1.0
        %v908 = vmin.f32 %v812, 1.0
        %v909 = vmin.f32 %v813, 1.0
        %v910 = vmin.f32 %v814, 1.0
        %v911 = vmin.f32 %v815, 1.0
        %v912 = vmin.f32 %v816, 1.0
        %v913 = vmin.f32 %v817, 1.0
        %v914 = vmin.f32 %v818, 1.0
        %v915 = vmin.f32 %v819, 1.0
        %v916 = vmin.f32 %v820, 1.0
        %v917 = vmin.f32 %v821, 1.0
        %v918 = vmin.f32 %v822, 1.0
        %v919 = vmin.f32 %v823, 1.0
        %v920 = vmin.f32 %v824, 1.0
        %v921 = vmin.f32 %v825, 1.0
        %v922 = vmin.f32 %v826, 1.0
        %v923 = vmin.f32 %v827, 1.0
        %v924 = vmin.f32 %v828, 1.0
        %v925 = vmin.f32 %v829, 1.0
        %v926 = vmin.f32 %v830, 1.0
        %v927 = vmin.f32 %v831, 1.0
        %v928 = vmin.f32 %v832, 1.0
        %v929 = vmin.f32 %v833, 1.0
        %v930 = vmin.f32 %v834, 1.0
        %v931 = vmin.f32 %v835, 1.0
        %v932 = vmin.f32 %v836, 1.0
        %v933 = vmin.f32 %v837, 1.0
        %v934 = vmin.f32 %v838, 1.0
        %v935 = vmin.f32 %v839, 1.0
        %v936 = vmin.f32 %v840, 1.0
        %v937 = vmin.f32 %v841, 1.0
        %v938 = vmin.f32 %v842, 1.0
        %v939 = vmin.f32 %v843, 1.0
        %v940 = vmin.f32 %v844, 1.0
        %v941 = vmin.f32 %v845, 1.0
        %v942 = vmin.f32 %v846, 1.0
        %v943 = vmin.f32 %v847, 1.0
        %v944 = vmin.f32 %v848, 1.0
        %v945 = vmin.f32 %v849, 1.0
        %v946 = vmin.f32 %v850, 1.0
        %v947 = vmin.f32 %v851, 1.0
        %v948 = vmin.f32 %v852, 1.0
        %v949 = vmin.f32 %v853, 1.0
        %v950 = vmin.f32 %v854, 1.0
        %v951 = vmin.f32 %v855, 1.0
        %v952 = vmin.f32 %v856, 1.0
        %v953 = vmin.f32 %v857, 1.0
        %v954 = vmin.f32 %v858, 1.0
        %v955 = vmin.f32 %v859, 1.0
        %v956 = vmin.f32 %v860, 1.0
        %v957 = vmin.f32 %v861, 1.0
        %v958 = vmin.f32 %v862, 1.0
        %v959 = vmin.f32 %v863, 1.0
        %v960 = vmin.f32 %v864, 1.0
        %v961 = vmin.f32 %v865, 1.0
        %v962 = vmin.f32 %v866, 1.0
        %v963 = vmin.f32 %v867, 1.0
        %v964 = vmin.f32 %v868, 1.0
        %v965 = vmin.f32 %v869, 1.0
        %v966 = vmin.f32 %v870, 1.0
        %v967 = vmin.f32 %v871, 1.0
        %v968 = vmin.f32 %v872, 1.0
        %v969 = vmin.f32 %v873, 1.0
        %v970 = vmin.f32 %v874, 1.0
        %v971 = vld [vmem:[%s284] sm:$0xff]
        %v972 = vld [vmem:[%s284 + $0x8] sm:$0xff]
        %v973 = vld [vmem:[%s284 + $0x10] sm:$0xff]
        %v974 = vld [vmem:[%s284 + $0x18] sm:$0xff]
        %v975 = vld [vmem:[%s284 + $0x20] sm:$0xff]
        %v976 = vld [vmem:[%s284 + $0x28] sm:$0xff]
        %v977 = vld [vmem:[%s284 + $0x30] sm:$0xff]
        %v978 = vld [vmem:[%s284 + $0x38] sm:$0xff]
        %v979 = vld [vmem:[%s284 + $0x40] sm:$0xff]
        %v980 = vld [vmem:[%s284 + $0x48] sm:$0xff]
        %v981 = vld [vmem:[%s284 + $0x50] sm:$0xff]
        %v982 = vld [vmem:[%s284 + $0x58] sm:$0xff]
        %v983 = vld [vmem:[%s284 + $0x60] sm:$0xff]
        %v984 = vld [vmem:[%s284 + $0x68] sm:$0xff]
        %v985 = vld [vmem:[%s284 + $0x70] sm:$0xff]
        %v986 = vld [vmem:[%s284 + $0x78] sm:$0xff]
        %v987 = vld [vmem:[%s284 + $0x80] sm:$0xff]
        %v988 = vld [vmem:[%s284 + $0x88] sm:$0xff]
        %v989 = vld [vmem:[%s284 + $0x90] sm:$0xff]
        %v990 = vld [vmem:[%s284 + $0x98] sm:$0xff]
        %v991 = vld [vmem:[%s284 + $0xa0] sm:$0xff]
        %v992 = vld [vmem:[%s284 + $0xa8] sm:$0xff]
        %v993 = vld [vmem:[%s284 + $0xb0] sm:$0xff]
        %v994 = vld [vmem:[%s284 + $0xb8] sm:$0xff]
        %v995 = vld [vmem:[%s284 + $0xc0] sm:$0xff]
        %v996 = vld [vmem:[%s284 + $0xc8] sm:$0xff]
        %v997 = vld [vmem:[%s284 + $0xd0] sm:$0xff]
        %v998 = vld [vmem:[%s284 + $0xd8] sm:$0xff]
        %v999 = vld [vmem:[%s284 + $0xe0] sm:$0xff]
        %v1000 = vld [vmem:[%s284 + $0xe8] sm:$0xff]
        %v1001 = vld [vmem:[%s284 + $0xf0] sm:$0xff]
        %v1002 = vld [vmem:[%s284 + $0xf8] sm:$0xff]
        %v1003 = vld [vmem:[%s284 + $0x100] sm:$0xff]
        %v1004 = vld [vmem:[%s284 + $0x108] sm:$0xff]
        %v1005 = vld [vmem:[%s284 + $0x110] sm:$0xff]
        %v1006 = vld [vmem:[%s284 + $0x118] sm:$0xff]
        %v1007 = vld [vmem:[%s284 + $0x120] sm:$0xff]
        %v1008 = vld [vmem:[%s284 + $0x128] sm:$0xff]
        %v1009 = vld [vmem:[%s284 + $0x130] sm:$0xff]
        %v1010 = vld [vmem:[%s284 + $0x138] sm:$0xff]
        %v1011 = vld [vmem:[%s284 + $0x140] sm:$0xff]
        %v1012 = vld [vmem:[%s284 + $0x148] sm:$0xff]
        %v1013 = vld [vmem:[%s284 + $0x150] sm:$0xff]
        %v1014 = vld [vmem:[%s284 + $0x158] sm:$0xff]
        %v1015 = vld [vmem:[%s284 + $0x160] sm:$0xff]
        %v1016 = vld [vmem:[%s284 + $0x168] sm:$0xff]
        %v1017 = vld [vmem:[%s284 + $0x170] sm:$0xff]
        %v1018 = vld [vmem:[%s284 + $0x178] sm:$0xff]
        %v1019 = vld [vmem:[%s284 + $0x180] sm:$0xff]
        %v1020 = vld [vmem:[%s284 + $0x188] sm:$0xff]
        %v1021 = vld [vmem:[%s284 + $0x190] sm:$0xff]
        %v1022 = vld [vmem:[%s284 + $0x198] sm:$0xff]
        %v1023 = vld [vmem:[%s284 + $0x1a0] sm:$0xff]
        %v1024 = vld [vmem:[%s284 + $0x1a8] sm:$0xff]
        %v1025 = vld [vmem:[%s284 + $0x1b0] sm:$0xff]
        %v1026 = vld [vmem:[%s284 + $0x1b8] sm:$0xff]
        %v1027 = vld [vmem:[%s284 + $0x1c0] sm:$0xff]
        %v1028 = vld [vmem:[%s284 + $0x1c8] sm:$0xff]
        %v1029 = vld [vmem:[%s284 + $0x1d0] sm:$0xff]
        %v1030 = vld [vmem:[%s284 + $0x1d8] sm:$0xff]
        %v1031 = vld [vmem:[%s284 + $0x1e0] sm:$0xff]
        %v1032 = vld [vmem:[%s284 + $0x1e8] sm:$0xff]
        %v1033 = vld [vmem:[%s284 + $0x1f0] sm:$0xff]
        %v1034 = vld [vmem:[%s284 + $0x1f8] sm:$0xff]
        %v1035 = vld [vmem:[%s284 + $0x200] sm:$0xff]
        %v1036 = vld [vmem:[%s284 + $0x208] sm:$0xff]
        %v1037 = vld [vmem:[%s284 + $0x210] sm:$0xff]
        %v1038 = vld [vmem:[%s284 + $0x218] sm:$0xff]
        %v1039 = vld [vmem:[%s284 + $0x220] sm:$0xff]
        %v1040 = vld [vmem:[%s284 + $0x228] sm:$0xff]
        %v1041 = vld [vmem:[%s284 + $0x230] sm:$0xff]
        %v1042 = vld [vmem:[%s284 + $0x238] sm:$0xff]
        %v1043 = vld [vmem:[%s284 + $0x240] sm:$0xff]
        %v1044 = vld [vmem:[%s284 + $0x248] sm:$0xff]
        %v1045 = vld [vmem:[%s284 + $0x250] sm:$0xff]
        %v1046 = vld [vmem:[%s284 + $0x258] sm:$0xff]
        %v1047 = vld [vmem:[%s284 + $0x260] sm:$0xff]
        %v1048 = vld [vmem:[%s284 + $0x268] sm:$0xff]
        %v1049 = vld [vmem:[%s284 + $0x270] sm:$0xff]
        %v1050 = vld [vmem:[%s284 + $0x278] sm:$0xff]
        %v1051 = vld [vmem:[%s284 + $0x280] sm:$0xff]
        %v1052 = vld [vmem:[%s284 + $0x288] sm:$0xff]
        %v1053 = vld [vmem:[%s284 + $0x290] sm:$0xff]
        %v1054 = vld [vmem:[%s284 + $0x298] sm:$0xff]
        %v1055 = vld [vmem:[%s284 + $0x2a0] sm:$0xff]
        %v1056 = vld [vmem:[%s284 + $0x2a8] sm:$0xff]
        %v1057 = vld [vmem:[%s284 + $0x2b0] sm:$0xff]
        %v1058 = vld [vmem:[%s284 + $0x2b8] sm:$0xff]
        %v1059 = vld [vmem:[%s284 + $0x2c0] sm:$0xff]
        %v1060 = vld [vmem:[%s284 + $0x2c8] sm:$0xff]
        %v1061 = vld [vmem:[%s284 + $0x2d0] sm:$0xff]
        %v1062 = vld [vmem:[%s284 + $0x2d8] sm:$0xff]
        %v1063 = vld [vmem:[%s284 + $0x2e0] sm:$0xff]
        %v1064 = vld [vmem:[%s284 + $0x2e8] sm:$0xff]
        %v1065 = vld [vmem:[%s284 + $0x2f0] sm:$0xff]
        %v1066 = vld [vmem:[%s284 + $0x2f8] sm:$0xff]
        %v1067 = vmax.f32 %v971, 0.0
        %v1068 = vmax.f32 %v972, 0.0
        %v1069 = vmax.f32 %v973, 0.0
        %v1070 = vmax.f32 %v974, 0.0
        %v1071 = vmax.f32 %v975, 0.0
        %v1072 = vmax.f32 %v976, 0.0
        %v1073 = vmax.f32 %v977, 0.0
        %v1074 = vmax.f32 %v978, 0.0
        %v1075 = vmax.f32 %v979, 0.0
        %v1076 = vmax.f32 %v980, 0.0
        %v1077 = vmax.f32 %v981, 0.0
        %v1078 = vmax.f32 %v982, 0.0
        %v1079 = vmax.f32 %v983, 0.0
        %v1080 = vmax.f32 %v984, 0.0
        %v1081 = vmax.f32 %v985, 0.0
        %v1082 = vmax.f32 %v986, 0.0
        %v1083 = vmax.f32 %v987, 0.0
        %v1084 = vmax.f32 %v988, 0.0
        %v1085 = vmax.f32 %v989, 0.0
        %v1086 = vmax.f32 %v990, 0.0
        %v1087 = vmax.f32 %v991, 0.0
        %v1088 = vmax.f32 %v992, 0.0
        %v1089 = vmax.f32 %v993, 0.0
        %v1090 = vmax.f32 %v994, 0.0
        %v1091 = vmax.f32 %v995, 0.0
        %v1092 = vmax.f32 %v996, 0.0
        %v1093 = vmax.f32 %v997, 0.0
        %v1094 = vmax.f32 %v998, 0.0
        %v1095 = vmax.f32 %v999, 0.0
        %v1096 = vmax.f32 %v1000, 0.0
        %v1097 = vmax.f32 %v1001, 0.0
        %v1098 = vmax.f32 %v1002, 0.0
        %v1099 = vmax.f32 %v1003, 0.0
        %v1100 = vmax.f32 %v1004, 0.0
        %v1101 = vmax.f32 %v1005, 0.0
        %v1102 = vmax.f32 %v1006, 0.0
        %v1103 = vmax.f32 %v1007, 0.0
        %v1104 = vmax.f32 %v1008, 0.0
        %v1105 = vmax.f32 %v1009, 0.0
        %v1106 = vmax.f32 %v1010, 0.0
        %v1107 = vmax.f32 %v1011, 0.0
        %v1108 = vmax.f32 %v1012, 0.0
        %v1109 = vmax.f32 %v1013, 0.0
        %v1110 = vmax.f32 %v1014, 0.0
        %v1111 = vmax.f32 %v1015, 0.0
        %v1112 = vmax.f32 %v1016, 0.0
        %v1113 = vmax.f32 %v1017, 0.0
        %v1114 = vmax.f32 %v1018, 0.0
        %v1115 = vmax.f32 %v1019, 0.0
        %v1116 = vmax.f32 %v1020, 0.0
        %v1117 = vmax.f32 %v1021, 0.0
        %v1118 = vmax.f32 %v1022, 0.0
        %v1119 = vmax.f32 %v1023, 0.0
        %v1120 = vmax.f32 %v1024, 0.0
        %v1121 = vmax.f32 %v1025, 0.0
        %v1122 = vmax.f32 %v1026, 0.0
        %v1123 = vmax.f32 %v1027, 0.0
        %v1124 = vmax.f32 %v1028, 0.0
        %v1125 = vmax.f32 %v1029, 0.0
        %v1126 = vmax.f32 %v1030, 0.0
        %v1127 = vmax.f32 %v1031, 0.0
        %v1128 = vmax.f32 %v1032, 0.0
        %v1129 = vmax.f32 %v1033, 0.0
        %v1130 = vmax.f32 %v1034, 0.0
        %v1131 = vmax.f32 %v1035, 0.0
        %v1132 = vmax.f32 %v1036, 0.0
        %v1133 = vmax.f32 %v1037, 0.0
        %v1134 = vmax.f32 %v1038, 0.0
        %v1135 = vmax.f32 %v1039, 0.0
        %v1136 = vmax.f32 %v1040, 0.0
        %v1137 = vmax.f32 %v1041, 0.0
        %v1138 = vmax.f32 %v1042, 0.0
        %v1139 = vmax.f32 %v1043, 0.0
        %v1140 = vmax.f32 %v1044, 0.0
        %v1141 = vmax.f32 %v1045, 0.0
        %v1142 = vmax.f32 %v1046, 0.0
        %v1143 = vmax.f32 %v1047, 0.0
        %v1144 = vmax.f32 %v1048, 0.0
        %v1145 = vmax.f32 %v1049, 0.0
        %v1146 = vmax.f32 %v1050, 0.0
        %v1147 = vmax.f32 %v1051, 0.0
        %v1148 = vmax.f32 %v1052, 0.0
        %v1149 = vmax.f32 %v1053, 0.0
        %v1150 = vmax.f32 %v1054, 0.0
        %v1151 = vmax.f32 %v1055, 0.0
        %v1152 = vmax.f32 %v1056, 0.0
        %v1153 = vmax.f32 %v1057, 0.0
        %v1154 = vmax.f32 %v1058, 0.0
        %v1155 = vmax.f32 %v1059, 0.0
        %v1156 = vmax.f32 %v1060, 0.0
        %v1157 = vmax.f32 %v1061, 0.0
        %v1158 = vmax.f32 %v1062, 0.0
        %v1159 = vmax.f32 %v1063, 0.0
        %v1160 = vmax.f32 %v1064, 0.0
        %v1161 = vmax.f32 %v1065, 0.0
        %v1162 = vmax.f32 %v1066, 0.0
        %v1163 = vmin.f32 %v1067, 1.0
        %v1164 = vmin.f32 %v1068, 1.0
        %v1165 = vmin.f32 %v1069, 1.0
        %v1166 = vmin.f32 %v1070, 1.0
        %v1167 = vmin.f32 %v1071, 1.0
        %v1168 = vmin.f32 %v1072, 1.0
        %v1169 = vmin.f32 %v1073, 1.0
        %v1170 = vmin.f32 %v1074, 1.0
        %v1171 = vmin.f32 %v1075, 1.0
        %v1172 = vmin.f32 %v1076, 1.0
        %v1173 = vmin.f32 %v1077, 1.0
        %v1174 = vmin.f32 %v1078, 1.0
        %v1175 = vmin.f32 %v1079, 1.0
        %v1176 = vmin.f32 %v1080, 1.0
        %v1177 = vmin.f32 %v1081, 1.0
        %v1178 = vmin.f32 %v1082, 1.0
        %v1179 = vmin.f32 %v1083, 1.0
        %v1180 = vmin.f32 %v1084, 1.0
        %v1181 = vmin.f32 %v1085, 1.0
        %v1182 = vmin.f32 %v1086, 1.0
        %v1183 = vmin.f32 %v1087, 1.0
        %v1184 = vmin.f32 %v1088, 1.0
        %v1185 = vmin.f32 %v1089, 1.0
        %v1186 = vmin.f32 %v1090, 1.0
        %v1187 = vmin.f32 %v1091, 1.0
        %v1188 = vmin.f32 %v1092, 1.0
        %v1189 = vmin.f32 %v1093, 1.0
        %v1190 = vmin.f32 %v1094, 1.0
        %v1191 = vmin.f32 %v1095, 1.0
        %v1192 = vmin.f32 %v1096, 1.0
        %v1193 = vmin.f32 %v1097, 1.0
        %v1194 = vmin.f32 %v1098, 1.0
        %v1195 = vmin.f32 %v1099, 1.0
        %v1196 = vmin.f32 %v1100, 1.0
        %v1197 = vmin.f32 %v1101, 1.0
        %v1198 = vmin.f32 %v1102, 1.0
        %v1199 = vmin.f32 %v1103, 1.0
        %v1200 = vmin.f32 %v1104, 1.0
        %v1201 = vmin.f32 %v1105, 1.0
        %v1202 = vmin.f32 %v1106, 1.0
        %v1203 = vmin.f32 %v1107, 1.0
        %v1204 = vmin.f32 %v1108, 1.0
        %v1205 = vmin.f32 %v1109, 1.0
        %v1206 = vmin.f32 %v1110, 1.0
        %v1207 = vmin.f32 %v1111, 1.0
        %v1208 = vmin.f32 %v1112, 1.0
        %v1209 = vmin.f32 %v1113, 1.0
        %v1210 = vmin.f32 %v1114, 1.0
        %v1211 = vmin.f32 %v1115, 1.0
        %v1212 = vmin.f32 %v1116, 1.0
        %v1213 = vmin.f32 %v1117, 1.0
        %v1214 = vmin.f32 %v1118, 1.0
        %v1215 = vmin.f32 %v1119, 1.0
        %v1216 = vmin.f32 %v1120, 1.0
        %v1217 = vmin.f32 %v1121, 1.0
        %v1218 = vmin.f32 %v1122, 1.0
        %v1219 = vmin.f32 %v1123, 1.0
        %v1220 = vmin.f32 %v1124, 1.0
        %v1221 = vmin.f32 %v1125, 1.0
        %v1222 = vmin.f32 %v1126, 1.0
        %v1223 = vmin.f32 %v1127, 1.0
        %v1224 = vmin.f32 %v1128, 1.0
        %v1225 = vmin.f32 %v1129, 1.0
        %v1226 = vmin.f32 %v1130, 1.0
        %v1227 = vmin.f32 %v1131, 1.0
        %v1228 = vmin.f32 %v1132, 1.0
        %v1229 = vmin.f32 %v1133, 1.0
        %v1230 = vmin.f32 %v1134, 1.0
        %v1231 = vmin.f32 %v1135, 1.0
        %v1232 = vmin.f32 %v1136, 1.0
        %v1233 = vmin.f32 %v1137, 1.0
        %v1234 = vmin.f32 %v1138, 1.0
        %v1235 = vmin.f32 %v1139, 1.0
        %v1236 = vmin.f32 %v1140, 1.0
        %v1237 = vmin.f32 %v1141, 1.0
        %v1238 = vmin.f32 %v1142, 1.0
        %v1239 = vmin.f32 %v1143, 1.0
        %v1240 = vmin.f32 %v1144, 1.0
        %v1241 = vmin.f32 %v1145, 1.0
        %v1242 = vmin.f32 %v1146, 1.0
        %v1243 = vmin.f32 %v1147, 1.0
        %v1244 = vmin.f32 %v1148, 1.0
        %v1245 = vmin.f32 %v1149, 1.0
        %v1246 = vmin.f32 %v1150, 1.0
        %v1247 = vmin.f32 %v1151, 1.0
        %v1248 = vmin.f32 %v1152, 1.0
        %v1249 = vmin.f32 %v1153, 1.0
        %v1250 = vmin.f32 %v1154, 1.0
        %v1251 = vmin.f32 %v1155, 1.0
        %v1252 = vmin.f32 %v1156, 1.0
        %v1253 = vmin.f32 %v1157, 1.0
        %v1254 = vmin.f32 %v1158, 1.0
        %v1255 = vmin.f32 %v1159, 1.0
        %v1256 = vmin.f32 %v1160, 1.0
        %v1257 = vmin.f32 %v1161, 1.0
        %v1258 = vmin.f32 %v1162, 1.0
        %v1259 = vsub.f32 %v1163, %v875
        %v1260 = vsub.f32 %v1164, %v876
        %v1261 = vsub.f32 %v1165, %v877
        %v1262 = vsub.f32 %v1166, %v878
        %v1263 = vsub.f32 %v1167, %v879
        %v1264 = vsub.f32 %v1168, %v880
        %v1265 = vsub.f32 %v1169, %v881
        %v1266 = vsub.f32 %v1170, %v882
        %v1267 = vsub.f32 %v1171, %v883
        %v1268 = vsub.f32 %v1172, %v884
        %v1269 = vsub.f32 %v1173, %v885
        %v1270 = vsub.f32 %v1174, %v886
        %v1271 = vsub.f32 %v1175, %v887
        %v1272 = vsub.f32 %v1176, %v888
        %v1273 = vsub.f32 %v1177, %v889
        %v1274 = vsub.f32 %v1178, %v890
        %v1275 = vsub.f32 %v1179, %v891
        %v1276 = vsub.f32 %v1180, %v892
        %v1277 = vsub.f32 %v1181, %v893
        %v1278 = vsub.f32 %v1182, %v894
        %v1279 = vsub.f32 %v1183, %v895
        %v1280 = vsub.f32 %v1184, %v896
        %v1281 = vsub.f32 %v1185, %v897
        %v1282 = vsub.f32 %v1186, %v898
        %v1283 = vsub.f32 %v1187, %v899
        %v1284 = vsub.f32 %v1188, %v900
        %v1285 = vsub.f32 %v1189, %v901
        %v1286 = vsub.f32 %v1190, %v902
        %v1287 = vsub.f32 %v1191, %v903
        %v1288 = vsub.f32 %v1192, %v904
        %v1289 = vsub.f32 %v1193, %v905
        %v1290 = vsub.f32 %v1194, %v906
        %v1291 = vsub.f32 %v1195, %v907
        %v1292 = vsub.f32 %v1196, %v908
        %v1293 = vsub.f32 %v1197, %v909
        %v1294 = vsub.f32 %v1198, %v910
        %v1295 = vsub.f32 %v1199, %v911
        %v1296 = vsub.f32 %v1200, %v912
        %v1297 = vsub.f32 %v1201, %v913
        %v1298 = vsub.f32 %v1202, %v914
        %v1299 = vsub.f32 %v1203, %v915
        %v1300 = vsub.f32 %v1204, %v916
        %v1301 = vsub.f32 %v1205, %v917
        %v1302 = vsub.f32 %v1206, %v918
        %v1303 = vsub.f32 %v1207, %v919
        %v1304 = vsub.f32 %v1208, %v920
        %v1305 = vsub.f32 %v1209, %v921
        %v1306 = vsub.f32 %v1210, %v922
        %v1307 = vsub.f32 %v1211, %v923
        %v1308 = vsub.f32 %v1212, %v924
        %v1309 = vsub.f32 %v1213, %v925
        %v1310 = vsub.f32 %v1214, %v926
        %v1311 = vsub.f32 %v1215, %v927
        %v1312 = vsub.f32 %v1216, %v928
        %v1313 = vsub.f32 %v1217, %v929
        %v1314 = vsub.f32 %v1218, %v930
        %v1315 = vsub.f32 %v1219, %v931
        %v1316 = vsub.f32 %v1220, %v932
        %v1317 = vsub.f32 %v1221, %v933
        %v1318 = vsub.f32 %v1222, %v934
        %v1319 = vsub.f32 %v1223, %v935
        %v1320 = vsub.f32 %v1224, %v936
        %v1321 = vsub.f32 %v1225, %v937
        %v1322 = vsub.f32 %v1226, %v938
        %v1323 = vsub.f32 %v1227, %v939
        %v1324 = vsub.f32 %v1228, %v940
        %v1325 = vsub.f32 %v1229, %v941
        %v1326 = vsub.f32 %v1230, %v942
        %v1327 = vsub.f32 %v1231, %v943
        %v1328 = vsub.f32 %v1232, %v944
        %v1329 = vsub.f32 %v1233, %v945
        %v1330 = vsub.f32 %v1234, %v946
        %v1331 = vsub.f32 %v1235, %v947
        %v1332 = vsub.f32 %v1236, %v948
        %v1333 = vsub.f32 %v1237, %v949
        %v1334 = vsub.f32 %v1238, %v950
        %v1335 = vsub.f32 %v1239, %v951
        %v1336 = vsub.f32 %v1240, %v952
        %v1337 = vsub.f32 %v1241, %v953
        %v1338 = vsub.f32 %v1242, %v954
        %v1339 = vsub.f32 %v1243, %v955
        %v1340 = vsub.f32 %v1244, %v956
        %v1341 = vsub.f32 %v1245, %v957
        %v1342 = vsub.f32 %v1246, %v958
        %v1343 = vsub.f32 %v1247, %v959
        %v1344 = vsub.f32 %v1248, %v960
        %v1345 = vsub.f32 %v1249, %v961
        %v1346 = vsub.f32 %v1250, %v962
        %v1347 = vsub.f32 %v1251, %v963
        %v1348 = vsub.f32 %v1252, %v964
        %v1349 = vsub.f32 %v1253, %v965
        %v1350 = vsub.f32 %v1254, %v966
        %v1351 = vsub.f32 %v1255, %v967
        %v1352 = vsub.f32 %v1256, %v968
        %v1353 = vsub.f32 %v1257, %v969
        %v1354 = vsub.f32 %v1258, %v970
        %v1355 = vmul.f32 %v1259, %v1259
        %v1356 = vmul.f32 %v1260, %v1260
        %v1357 = vmul.f32 %v1261, %v1261
        %v1358 = vmul.f32 %v1262, %v1262
        %v1359 = vmul.f32 %v1263, %v1263
        %v1360 = vmul.f32 %v1264, %v1264
        %v1361 = vmul.f32 %v1265, %v1265
        %v1362 = vmul.f32 %v1266, %v1266
        %v1363 = vmul.f32 %v1267, %v1267
        %v1364 = vmul.f32 %v1268, %v1268
        %v1365 = vmul.f32 %v1269, %v1269
        %v1366 = vmul.f32 %v1270, %v1270
        %v1367 = vmul.f32 %v1271, %v1271
        %v1368 = vmul.f32 %v1272, %v1272
        %v1369 = vmul.f32 %v1273, %v1273
        %v1370 = vmul.f32 %v1274, %v1274
        %v1371 = vmul.f32 %v1275, %v1275
        %v1372 = vmul.f32 %v1276, %v1276
        %v1373 = vmul.f32 %v1277, %v1277
        %v1374 = vmul.f32 %v1278, %v1278
        %v1375 = vmul.f32 %v1279, %v1279
        %v1376 = vmul.f32 %v1280, %v1280
        %v1377 = vmul.f32 %v1281, %v1281
        %v1378 = vmul.f32 %v1282, %v1282
        %v1379 = vmul.f32 %v1283, %v1283
        %v1380 = vmul.f32 %v1284, %v1284
        %v1381 = vmul.f32 %v1285, %v1285
        %v1382 = vmul.f32 %v1286, %v1286
        %v1383 = vmul.f32 %v1287, %v1287
        %v1384 = vmul.f32 %v1288, %v1288
        %v1385 = vmul.f32 %v1289, %v1289
        %v1386 = vmul.f32 %v1290, %v1290
        %v1387 = vmul.f32 %v1291, %v1291
        %v1388 = vmul.f32 %v1292, %v1292
        %v1389 = vmul.f32 %v1293, %v1293
        %v1390 = vmul.f32 %v1294, %v1294
        %v1391 = vmul.f32 %v1295, %v1295
        %v1392 = vmul.f32 %v1296, %v1296
        %v1393 = vmul.f32 %v1297, %v1297
        %v1394 = vmul.f32 %v1298, %v1298
        %v1395 = vmul.f32 %v1299, %v1299
        %v1396 = vmul.f32 %v1300, %v1300
        %v1397 = vmul.f32 %v1301, %v1301
        %v1398 = vmul.f32 %v1302, %v1302
        %v1399 = vmul.f32 %v1303, %v1303
        %v1400 = vmul.f32 %v1304, %v1304
        %v1401 = vmul.f32 %v1305, %v1305
        %v1402 = vmul.f32 %v1306, %v1306
        %v1403 = vmul.f32 %v1307, %v1307
        %v1404 = vmul.f32 %v1308, %v1308
        %v1405 = vmul.f32 %v1309, %v1309
        %v1406 = vmul.f32 %v1310, %v1310
        %v1407 = vmul.f32 %v1311, %v1311
        %v1408 = vmul.f32 %v1312, %v1312
        %v1409 = vmul.f32 %v1313, %v1313
        %v1410 = vmul.f32 %v1314, %v1314
        %v1411 = vmul.f32 %v1315, %v1315
        %v1412 = vmul.f32 %v1316, %v1316
        %v1413 = vmul.f32 %v1317, %v1317
        %v1414 = vmul.f32 %v1318, %v1318
        %v1415 = vmul.f32 %v1319, %v1319
        %v1416 = vmul.f32 %v1320, %v1320
        %v1417 = vmul.f32 %v1321, %v1321
        %v1418 = vmul.f32 %v1322, %v1322
        %v1419 = vmul.f32 %v1323, %v1323
        %v1420 = vmul.f32 %v1324, %v1324
        %v1421 = vmul.f32 %v1325, %v1325
        %v1422 = vmul.f32 %v1326, %v1326
        %v1423 = vmul.f32 %v1327, %v1327
        %v1424 = vmul.f32 %v1328, %v1328
        %v1425 = vmul.f32 %v1329, %v1329
        %v1426 = vmul.f32 %v1330, %v1330
        %v1427 = vmul.f32 %v1331, %v1331
        %v1428 = vmul.f32 %v1332, %v1332
        %v1429 = vmul.f32 %v1333, %v1333
        %v1430 = vmul.f32 %v1334, %v1334
        %v1431 = vmul.f32 %v1335, %v1335
        %v1432 = vmul.f32 %v1336, %v1336
        %v1433 = vmul.f32 %v1337, %v1337
        %v1434 = vmul.f32 %v1338, %v1338
        %v1435 = vmul.f32 %v1339, %v1339
        %v1436 = vmul.f32 %v1340, %v1340
        %v1437 = vmul.f32 %v1341, %v1341
        %v1438 = vmul.f32 %v1342, %v1342
        %v1439 = vmul.f32 %v1343, %v1343
        %v1440 = vmul.f32 %v1344, %v1344
        %v1441 = vmul.f32 %v1345, %v1345
        %v1442 = vmul.f32 %v1346, %v1346
        %v1443 = vmul.f32 %v1347, %v1347
        %v1444 = vmul.f32 %v1348, %v1348
        %v1445 = vmul.f32 %v1349, %v1349
        %v1446 = vmul.f32 %v1350, %v1350
        %v1447 = vmul.f32 %v1351, %v1351
        %v1448 = vmul.f32 %v1352, %v1352
        %v1449 = vmul.f32 %v1353, %v1353
        %v1450 = vmul.f32 %v1354, %v1354
        %v1451 = vadd.f32 %v1355, %v1356
        %v1452 = vadd.f32 %v1451, %v1357
        %v1453 = vadd.f32 %v1452, %v1358
        %v1454 = vadd.f32 %v1453, %v1359
        %v1455 = vadd.f32 %v1454, %v1360
        %1456 = vadd.xlane.f32.xlu0 %v1455
        %v1457 = vpop.xlane.xlu0 %1456
        %v1458 = vadd.f32 %v1361, %v1362
        %v1459 = vadd.f32 %v1458, %v1363
        %v1460 = vadd.f32 %v1459, %v1364
        %v1461 = vadd.f32 %v1460, %v1365
        %v1462 = vadd.f32 %v1461, %v1366
        %1463 = vadd.xlane.f32.xlu0 %v1462
        %v1464 = vpop.xlane.xlu0 %1463
        %v1465 = vadd.f32 %v1367, %v1368
        %v1466 = vadd.f32 %v1465, %v1369
        %v1467 = vadd.f32 %v1466, %v1370
        %v1468 = vadd.f32 %v1467, %v1371
        %v1469 = vadd.f32 %v1468, %v1372
        %1470 = vadd.xlane.f32.xlu0 %v1469
        %v1471 = vpop.xlane.xlu0 %1470
        %v1472 = vadd.f32 %v1373, %v1374
        %v1473 = vadd.f32 %v1472, %v1375
        %v1474 = vadd.f32 %v1473, %v1376
        %v1475 = vadd.f32 %v1474, %v1377
        %v1476 = vadd.f32 %v1475, %v1378
        %1477 = vadd.xlane.f32.xlu0 %v1476
        %v1478 = vpop.xlane.xlu0 %1477
        %v1479 = vadd.f32 %v1379, %v1380
        %v1480 = vadd.f32 %v1479, %v1381
        %v1481 = vadd.f32 %v1480, %v1382
        %v1482 = vadd.f32 %v1481, %v1383
        %v1483 = vadd.f32 %v1482, %v1384
        %1484 = vadd.xlane.f32.xlu0 %v1483
        %v1485 = vpop.xlane.xlu0 %1484
        %v1486 = vadd.f32 %v1385, %v1386
        %v1487 = vadd.f32 %v1486, %v1387
        %v1488 = vadd.f32 %v1487, %v1388
        %v1489 = vadd.f32 %v1488, %v1389
        %v1490 = vadd.f32 %v1489, %v1390
        %1491 = vadd.xlane.f32.xlu0 %v1490
        %v1492 = vpop.xlane.xlu0 %1491
        %v1493 = vadd.f32 %v1391, %v1392
        %v1494 = vadd.f32 %v1493, %v1393
        %v1495 = vadd.f32 %v1494, %v1394
        %v1496 = vadd.f32 %v1495, %v1395
        %v1497 = vadd.f32 %v1496, %v1396
        %1498 = vadd.xlane.f32.xlu0 %v1497
        %v1499 = vpop.xlane.xlu0 %1498
        %v1500 = vadd.f32 %v1397, %v1398
        %v1501 = vadd.f32 %v1500, %v1399
        %v1502 = vadd.f32 %v1501, %v1400
        %v1503 = vadd.f32 %v1502, %v1401
        %v1504 = vadd.f32 %v1503, %v1402
        %1505 = vadd.xlane.f32.xlu0 %v1504
        %v1506 = vpop.xlane.xlu0 %1505
        %v1507 = vadd.f32 %v1403, %v1404
        %v1508 = vadd.f32 %v1507, %v1405
        %v1509 = vadd.f32 %v1508, %v1406
        %v1510 = vadd.f32 %v1509, %v1407
        %v1511 = vadd.f32 %v1510, %v1408
        %1512 = vadd.xlane.f32.xlu0 %v1511
        %v1513 = vpop.xlane.xlu0 %1512
        %v1514 = vadd.f32 %v1409, %v1410
        %v1515 = vadd.f32 %v1514, %v1411
        %v1516 = vadd.f32 %v1515, %v1412
        %v1517 = vadd.f32 %v1516, %v1413
        %v1518 = vadd.f32 %v1517, %v1414
        %1519 = vadd.xlane.f32.xlu0 %v1518
        %v1520 = vpop.xlane.xlu0 %1519
        %v1521 = vadd.f32 %v1415, %v1416
        %v1522 = vadd.f32 %v1521, %v1417
        %v1523 = vadd.f32 %v1522, %v1418
        %v1524 = vadd.f32 %v1523, %v1419
        %v1525 = vadd.f32 %v1524, %v1420
        %1526 = vadd.xlane.f32.xlu0 %v1525
        %v1527 = vpop.xlane.xlu0 %1526
        %v1528 = vadd.f32 %v1421, %v1422
        %v1529 = vadd.f32 %v1528, %v1423
        %v1530 = vadd.f32 %v1529, %v1424
        %v1531 = vadd.f32 %v1530, %v1425
        %v1532 = vadd.f32 %v1531, %v1426
        %1533 = vadd.xlane.f32.xlu0 %v1532
        %v1534 = vpop.xlane.xlu0 %1533
        %v1535 = vadd.f32 %v1427, %v1428
        %v1536 = vadd.f32 %v1535, %v1429
        %v1537 = vadd.f32 %v1536, %v1430
        %v1538 = vadd.f32 %v1537, %v1431
        %v1539 = vadd.f32 %v1538, %v1432
        %1540 = vadd.xlane.f32.xlu0 %v1539
        %v1541 = vpop.xlane.xlu0 %1540
        %v1542 = vadd.f32 %v1433, %v1434
        %v1543 = vadd.f32 %v1542, %v1435
        %v1544 = vadd.f32 %v1543, %v1436
        %v1545 = vadd.f32 %v1544, %v1437
        %v1546 = vadd.f32 %v1545, %v1438
        %1547 = vadd.xlane.f32.xlu0 %v1546
        %v1548 = vpop.xlane.xlu0 %1547
        %v1549 = vadd.f32 %v1439, %v1440
        %v1550 = vadd.f32 %v1549, %v1441
        %v1551 = vadd.f32 %v1550, %v1442
        %v1552 = vadd.f32 %v1551, %v1443
        %v1553 = vadd.f32 %v1552, %v1444
        %1554 = vadd.xlane.f32.xlu0 %v1553
        %v1555 = vpop.xlane.xlu0 %1554
        %v1556 = vadd.f32 %v1445, %v1446
        %v1557 = vadd.f32 %v1556, %v1447
        %v1558 = vadd.f32 %v1557, %v1448
        %v1559 = vadd.f32 %v1558, %v1449
        %v1560 = vadd.f32 %v1559, %v1450
        %1561 = vadd.xlane.f32.xlu0 %v1560
        %v1562 = vpop.xlane.xlu0 %1561
        %v1563 = vrcp.pop 768.0
        %v1564 = vmul.f32 %v1457, %v1563
        %v1565 = vmul.f32 %v1464, %v1563
        %v1566 = vmul.f32 %v1471, %v1563
        %v1567 = vmul.f32 %v1478, %v1563
        %v1568 = vmul.f32 %v1485, %v1563
        %v1569 = vmul.f32 %v1492, %v1563
        %v1570 = vmul.f32 %v1499, %v1563
        %v1571 = vmul.f32 %v1506, %v1563
        %v1572 = vmul.f32 %v1513, %v1563
        %v1573 = vmul.f32 %v1520, %v1563
        %v1574 = vmul.f32 %v1527, %v1563
        %v1575 = vmul.f32 %v1534, %v1563
        %v1576 = vmul.f32 %v1541, %v1563
        %v1577 = vmul.f32 %v1548, %v1563
        %v1578 = vmul.f32 %v1555, %v1563
        %v1579 = vmul.f32 %v1562, %v1563
        %v1596 = vlaneseq
        %v1597 = vand.u32 %v1596, 127
        %v1598 = vlaneseq
        %v1599 = vshrl.u32 %v1598, 7
        %v1600 = vsub.s32 %v1597, %v1599
        %v1601 = vrot.slane %v1564, %v1600
        %v1602 = vadd.s32 %v1597, 4294967288
        %v1603 = vlaneseq
        %v1604 = vshrl.u32 %v1603, 7
        %v1605 = vsub.s32 %v1602, %v1604
        %v1606 = vrot.slane %v1565, %v1605
        %vm1607 = vcmask 130112
        %v1608 = vsel %vm1607, %v1606, %v1601
        %v1609 = vadd.s32 %v1597, 4294967280
        %v1610 = vlaneseq
        %v1611 = vshrl.u32 %v1610, 7
        %v1612 = vsub.s32 %v1609, %v1611
        %v1613 = vrot.slane %v1566, %v1612
        %vm1614 = vcmask 195712
        %v1615 = vsel %vm1614, %v1613, %v1608
        %v1616 = vadd.s32 %v1597, 4294967272
        %v1617 = vlaneseq
        %v1618 = vshrl.u32 %v1617, 7
        %v1619 = vsub.s32 %v1616, %v1618
        %v1620 = vrot.slane %v1567, %v1619
        %vm1621 = vcmask 261312
        %v1622 = vsel %vm1621, %v1620, %v1615
        %v1623 = vadd.s32 %v1597, 4294967264
        %v1624 = vlaneseq
        %v1625 = vshrl.u32 %v1624, 7
        %v1626 = vsub.s32 %v1623, %v1625
        %v1627 = vrot.slane %v1568, %v1626
        %vm1628 = vcmask 326912
        %v1629 = vsel %vm1628, %v1627, %v1622
        %v1630 = vadd.s32 %v1597, 4294967256
        %v1631 = vlaneseq
        %v1632 = vshrl.u32 %v1631, 7
        %v1633 = vsub.s32 %v1630, %v1632
        %v1634 = vrot.slane %v1569, %v1633
        %vm1635 = vcmask 392512
        %v1636 = vsel %vm1635, %v1634, %v1629
        %v1637 = vadd.s32 %v1597, 4294967248
        %v1638 = vlaneseq
        %v1639 = vshrl.u32 %v1638, 7
        %v1640 = vsub.s32 %v1637, %v1639
        %v1641 = vrot.slane %v1570, %v1640
        %vm1642 = vcmask 458112
        %v1643 = vsel %vm1642, %v1641, %v1636
        %v1644 = vadd.s32 %v1597, 4294967240
        %v1645 = vlaneseq
        %v1646 = vshrl.u32 %v1645, 7
        %v1647 = vsub.s32 %v1644, %v1646
        %v1648 = vrot.slane %v1571, %v1647
        %vm1649 = vcmask 523712
        %v1650 = vsel %vm1649, %v1648, %v1643
        %v1651 = vadd.s32 %v1597, 4294967232
        %v1652 = vlaneseq
        %v1653 = vshrl.u32 %v1652, 7
        %v1654 = vsub.s32 %v1651, %v1653
        %v1655 = vrot.slane %v1572, %v1654
        %vm1656 = vcmask 589312
        %v1657 = vsel %vm1656, %v1655, %v1650
        %v1658 = vadd.s32 %v1597, 4294967224
        %v1659 = vlaneseq
        %v1660 = vshrl.u32 %v1659, 7
        %v1661 = vsub.s32 %v1658, %v1660
        %v1662 = vrot.slane %v1573, %v1661
        %vm1663 = vcmask 654912
        %v1664 = vsel %vm1663, %v1662, %v1657
        %v1665 = vadd.s32 %v1597, 4294967216
        %v1666 = vlaneseq
        %v1667 = vshrl.u32 %v1666, 7
        %v1668 = vsub.s32 %v1665, %v1667
        %v1669 = vrot.slane %v1574, %v1668
        %vm1670 = vcmask 720512
        %v1671 = vsel %vm1670, %v1669, %v1664
        %v1672 = vadd.s32 %v1597, 4294967208
        %v1673 = vlaneseq
        %v1674 = vshrl.u32 %v1673, 7
        %v1675 = vsub.s32 %v1672, %v1674
        %v1676 = vrot.slane %v1575, %v1675
        %vm1677 = vcmask 786112
        %v1678 = vsel %vm1677, %v1676, %v1671
        %v1679 = vadd.s32 %v1597, 4294967200
        %v1680 = vlaneseq
        %v1681 = vshrl.u32 %v1680, 7
        %v1682 = vsub.s32 %v1679, %v1681
        %v1683 = vrot.slane %v1576, %v1682
        %vm1684 = vcmask 851712
        %v1685 = vsel %vm1684, %v1683, %v1678
        %v1686 = vadd.s32 %v1597, 4294967192
        %v1687 = vlaneseq
        %v1688 = vshrl.u32 %v1687, 7
        %v1689 = vsub.s32 %v1686, %v1688
        %v1690 = vrot.slane %v1577, %v1689
        %vm1691 = vcmask 917312
        %v1692 = vsel %vm1691, %v1690, %v1685
        %v1693 = vadd.s32 %v1597, 4294967184
        %v1694 = vlaneseq
        %v1695 = vshrl.u32 %v1694, 7
        %v1696 = vsub.s32 %v1693, %v1695
        %v1697 = vrot.slane %v1578, %v1696
        %vm1698 = vcmask 982912
        %v1699 = vsel %vm1698, %v1697, %v1692
        %v1700 = vadd.s32 %v1597, 4294967176
        %v1701 = vlaneseq
        %v1702 = vshrl.u32 %v1701, 7
        %v1703 = vsub.s32 %v1700, %v1702
        %v1704 = vrot.slane %v1579, %v1703
        %vm1705 = vcmask 1048512
        %v1706 = vsel %vm1705, %v1704, %v1699
        %1708 = vst [vmem:[%s272] sm:$0x1] %v1706
        %v1709 = vpack.c.bf16 %v1265, %v1259
        %v1710 = vpack.c.bf16 %v1266, %v1260
        %v1711 = vpack.c.bf16 %v1267, %v1261
        %v1712 = vpack.c.bf16 %v1268, %v1262
        %v1713 = vpack.c.bf16 %v1269, %v1263
        %v1714 = vpack.c.bf16 %v1270, %v1264
        %v1715 = vpack.c.bf16 %v1277, %v1271
        %v1716 = vpack.c.bf16 %v1278, %v1272
        %v1717 = vpack.c.bf16 %v1279, %v1273
        %v1718 = vpack.c.bf16 %v1280, %v1274
        %v1719 = vpack.c.bf16 %v1281, %v1275
        %v1720 = vpack.c.bf16 %v1282, %v1276
        %v1721 = vpack.c.bf16 %v1289, %v1283
        %v1722 = vpack.c.bf16 %v1290, %v1284
        %v1723 = vpack.c.bf16 %v1291, %v1285
        %v1724 = vpack.c.bf16 %v1292, %v1286
        %v1725 = vpack.c.bf16 %v1293, %v1287
        %v1726 = vpack.c.bf16 %v1294, %v1288
        %v1727 = vpack.c.bf16 %v1301, %v1295
        %v1728 = vpack.c.bf16 %v1302, %v1296
        %v1729 = vpack.c.bf16 %v1303, %v1297
        %v1730 = vpack.c.bf16 %v1304, %v1298
        %v1731 = vpack.c.bf16 %v1305, %v1299
        %v1732 = vpack.c.bf16 %v1306, %v1300
        %v1733 = vpack.c.bf16 %v1313, %v1307
        %v1734 = vpack.c.bf16 %v1314, %v1308
        %v1735 = vpack.c.bf16 %v1315, %v1309
        %v1736 = vpack.c.bf16 %v1316, %v1310
        %v1737 = vpack.c.bf16 %v1317, %v1311
        %v1738 = vpack.c.bf16 %v1318, %v1312
        %v1739 = vpack.c.bf16 %v1325, %v1319
        %v1740 = vpack.c.bf16 %v1326, %v1320
        %v1741 = vpack.c.bf16 %v1327, %v1321
        %v1742 = vpack.c.bf16 %v1328, %v1322
        %v1743 = vpack.c.bf16 %v1329, %v1323
        %v1744 = vpack.c.bf16 %v1330, %v1324
        %v1745 = vpack.c.bf16 %v1337, %v1331
        %v1746 = vpack.c.bf16 %v1338, %v1332
        %v1747 = vpack.c.bf16 %v1339, %v1333
        %v1748 = vpack.c.bf16 %v1340, %v1334
        %v1749 = vpack.c.bf16 %v1341, %v1335
        %v1750 = vpack.c.bf16 %v1342, %v1336
        %v1751 = vpack.c.bf16 %v1349, %v1343
        %v1752 = vpack.c.bf16 %v1350, %v1344
        %v1753 = vpack.c.bf16 %v1351, %v1345
        %v1754 = vpack.c.bf16 %v1352, %v1346
        %v1755 = vpack.c.bf16 %v1353, %v1347
        %v1756 = vpack.c.bf16 %v1354, %v1348
        %v1757 = vld [vmem:[%s4] sm:$0xf]
        %v1758 = vld [vmem:[%s4 + $0x4] sm:$0xf]
        %v1759 = vld [vmem:[%s4 + $0x8] sm:$0xf]
        %v1760 = vld [vmem:[%s4 + $0xc] sm:$0xf]
        %v1761 = vld [vmem:[%s4 + $0x10] sm:$0xf]
        %v1762 = vld [vmem:[%s4 + $0x14] sm:$0xf]
        %v1763 = vld [vmem:[%s4 + $0x18] sm:$0xf]
        %v1764 = vld [vmem:[%s4 + $0x1c] sm:$0xf]
        %v1765 = vld [vmem:[%s4 + $0x20] sm:$0xf]
        %v1766 = vld [vmem:[%s4 + $0x24] sm:$0xf]
        %v1767 = vld [vmem:[%s4 + $0x28] sm:$0xf]
        %v1768 = vld [vmem:[%s4 + $0x2c] sm:$0xf]
        %v1769 = vld [vmem:[%s4 + $0x30] sm:$0xf]
        %v1770 = vld [vmem:[%s4 + $0x34] sm:$0xf]
        %v1771 = vld [vmem:[%s4 + $0x38] sm:$0xf]
        %v1772 = vld [vmem:[%s4 + $0x3c] sm:$0xf]
        %v1773 = vld [vmem:[%s4 + $0x40] sm:$0xf]
        %v1774 = vld [vmem:[%s4 + $0x44] sm:$0xf]
        %v1775 = vld [vmem:[%s4 + $0x48] sm:$0xf]
        %v1776 = vld [vmem:[%s4 + $0x4c] sm:$0xf]
        %v1777 = vld [vmem:[%s4 + $0x50] sm:$0xf]
        %v1778 = vld [vmem:[%s4 + $0x54] sm:$0xf]
        %v1779 = vld [vmem:[%s4 + $0x58] sm:$0xf]
        %v1780 = vld [vmem:[%s4 + $0x5c] sm:$0xf]
        %v1781 = vld [vmem:[%s4 + $0x60] sm:$0xf]
        %v1782 = vld [vmem:[%s4 + $0x64] sm:$0xf]
        %v1783 = vld [vmem:[%s4 + $0x68] sm:$0xf]
        %v1784 = vld [vmem:[%s4 + $0x6c] sm:$0xf]
        %v1785 = vld [vmem:[%s4 + $0x70] sm:$0xf]
        %v1786 = vld [vmem:[%s4 + $0x74] sm:$0xf]
        %v1787 = vld [vmem:[%s4 + $0x78] sm:$0xf]
        %v1788 = vld [vmem:[%s4 + $0x7c] sm:$0xf]
        %v1789 = vld [vmem:[%s4 + $0x80] sm:$0xf]
        %v1790 = vld [vmem:[%s4 + $0x84] sm:$0xf]
        %v1791 = vld [vmem:[%s4 + $0x88] sm:$0xf]
        %v1792 = vld [vmem:[%s4 + $0x8c] sm:$0xf]
        %v1793 = vld [vmem:[%s4 + $0x90] sm:$0xf]
        %v1794 = vld [vmem:[%s4 + $0x94] sm:$0xf]
        %v1795 = vld [vmem:[%s4 + $0x98] sm:$0xf]
        %v1796 = vld [vmem:[%s4 + $0x9c] sm:$0xf]
        %v1797 = vld [vmem:[%s4 + $0xa0] sm:$0xf]
        %v1798 = vld [vmem:[%s4 + $0xa4] sm:$0xf]
        %v1799 = vld [vmem:[%s4 + $0xa8] sm:$0xf]
        %v1800 = vld [vmem:[%s4 + $0xac] sm:$0xf]
        %v1801 = vld [vmem:[%s4 + $0xb0] sm:$0xf]
        %v1802 = vld [vmem:[%s4 + $0xb4] sm:$0xf]
        %v1803 = vld [vmem:[%s4 + $0xb8] sm:$0xf]
        %v1804 = vld [vmem:[%s4 + $0xbc] sm:$0xf]
        %v1805 = vld [vmem:[%s4 + $0xc0] sm:$0xf]
        %v1806 = vld [vmem:[%s4 + $0xc4] sm:$0xf]
        %v1807 = vld [vmem:[%s4 + $0xc8] sm:$0xf]
        %v1808 = vld [vmem:[%s4 + $0xcc] sm:$0xf]
        %v1809 = vld [vmem:[%s4 + $0xd0] sm:$0xf]
        %v1810 = vld [vmem:[%s4 + $0xd4] sm:$0xf]
        %v1811 = vld [vmem:[%s4 + $0xd8] sm:$0xf]
        %v1812 = vld [vmem:[%s4 + $0xdc] sm:$0xf]
        %v1813 = vld [vmem:[%s4 + $0xe0] sm:$0xf]
        %v1814 = vld [vmem:[%s4 + $0xe4] sm:$0xf]
        %v1815 = vld [vmem:[%s4 + $0xe8] sm:$0xf]
        %v1816 = vld [vmem:[%s4 + $0xec] sm:$0xf]
        %v1817 = vld [vmem:[%s4 + $0xf0] sm:$0xf]
        %v1818 = vld [vmem:[%s4 + $0xf4] sm:$0xf]
        %v1819 = vld [vmem:[%s4 + $0xf8] sm:$0xf]
        %v1820 = vld [vmem:[%s4 + $0xfc] sm:$0xf]
        %v1821 = vld [vmem:[%s4 + $0x100] sm:$0xf]
        %v1822 = vld [vmem:[%s4 + $0x104] sm:$0xf]
        %v1823 = vld [vmem:[%s4 + $0x108] sm:$0xf]
        %v1824 = vld [vmem:[%s4 + $0x10c] sm:$0xf]
        %v1825 = vld [vmem:[%s4 + $0x110] sm:$0xf]
        %v1826 = vld [vmem:[%s4 + $0x114] sm:$0xf]
        %v1827 = vld [vmem:[%s4 + $0x118] sm:$0xf]
        %v1828 = vld [vmem:[%s4 + $0x11c] sm:$0xf]
        %v1829 = vld [vmem:[%s4 + $0x120] sm:$0xf]
        %v1830 = vld [vmem:[%s4 + $0x124] sm:$0xf]
        %v1831 = vld [vmem:[%s4 + $0x128] sm:$0xf]
        %v1832 = vld [vmem:[%s4 + $0x12c] sm:$0xf]
        %v1833 = vld [vmem:[%s4 + $0x130] sm:$0xf]
        %v1834 = vld [vmem:[%s4 + $0x134] sm:$0xf]
        %v1835 = vld [vmem:[%s4 + $0x138] sm:$0xf]
        %v1836 = vld [vmem:[%s4 + $0x13c] sm:$0xf]
        %v1837 = vld [vmem:[%s4 + $0x140] sm:$0xf]
        %v1838 = vld [vmem:[%s4 + $0x144] sm:$0xf]
        %v1839 = vld [vmem:[%s4 + $0x148] sm:$0xf]
        %v1840 = vld [vmem:[%s4 + $0x14c] sm:$0xf]
        %v1841 = vld [vmem:[%s4 + $0x150] sm:$0xf]
        %v1842 = vld [vmem:[%s4 + $0x154] sm:$0xf]
        %v1843 = vld [vmem:[%s4 + $0x158] sm:$0xf]
        %v1844 = vld [vmem:[%s4 + $0x15c] sm:$0xf]
        %v1845 = vld [vmem:[%s4 + $0x160] sm:$0xf]
        %v1846 = vld [vmem:[%s4 + $0x164] sm:$0xf]
        %v1847 = vld [vmem:[%s4 + $0x168] sm:$0xf]
        %v1848 = vld [vmem:[%s4 + $0x16c] sm:$0xf]
        %v1849 = vld [vmem:[%s4 + $0x170] sm:$0xf]
        %v1850 = vld [vmem:[%s4 + $0x174] sm:$0xf]
        %v1851 = vld [vmem:[%s4 + $0x178] sm:$0xf]
        %v1852 = vld [vmem:[%s4 + $0x17c] sm:$0xf]
        %v1949 = vunpack.c.l.b16 %v1757
        %v1950 = vunpack.c.l.b16 %v1758
        %v1951 = vunpack.c.l.b16 %v1759
        %v1952 = vunpack.c.l.b16 %v1760
        %v1953 = vunpack.c.l.b16 %v1761
        %v1954 = vunpack.c.l.b16 %v1762
        %v1955 = vunpack.c.l.b16 %v1763
        %v1956 = vunpack.c.l.b16 %v1764
        %v1957 = vunpack.c.l.b16 %v1765
        %v1958 = vunpack.c.l.b16 %v1766
        %v1959 = vunpack.c.l.b16 %v1767
        %v1960 = vunpack.c.l.b16 %v1768
        %v1961 = vunpack.c.l.b16 %v1769
        %v1962 = vunpack.c.l.b16 %v1770
        %v1963 = vunpack.c.l.b16 %v1771
        %v1964 = vunpack.c.l.b16 %v1772
        %v1965 = vunpack.c.l.b16 %v1773
        %v1966 = vunpack.c.l.b16 %v1774
        %v1967 = vunpack.c.l.b16 %v1775
        %v1968 = vunpack.c.l.b16 %v1776
        %v1969 = vunpack.c.l.b16 %v1777
        %v1970 = vunpack.c.l.b16 %v1778
        %v1971 = vunpack.c.l.b16 %v1779
        %v1972 = vunpack.c.l.b16 %v1780
        %v1973 = vunpack.c.l.b16 %v1781
        %v1974 = vunpack.c.l.b16 %v1782
        %v1975 = vunpack.c.l.b16 %v1783
        %v1976 = vunpack.c.l.b16 %v1784
        %v1977 = vunpack.c.l.b16 %v1785
        %v1978 = vunpack.c.l.b16 %v1786
        %v1979 = vunpack.c.l.b16 %v1787
        %v1980 = vunpack.c.l.b16 %v1788
        %v1981 = vunpack.c.l.b16 %v1789
        %v1982 = vunpack.c.l.b16 %v1790
        %v1983 = vunpack.c.l.b16 %v1791
        %v1984 = vunpack.c.l.b16 %v1792
        %v1985 = vunpack.c.l.b16 %v1793
        %v1986 = vunpack.c.l.b16 %v1794
        %v1987 = vunpack.c.l.b16 %v1795
        %v1988 = vunpack.c.l.b16 %v1796
        %v1989 = vunpack.c.l.b16 %v1797
        %v1990 = vunpack.c.l.b16 %v1798
        %v1991 = vunpack.c.l.b16 %v1799
        %v1992 = vunpack.c.l.b16 %v1800
        %v1993 = vunpack.c.l.b16 %v1801
        %v1994 = vunpack.c.l.b16 %v1802
        %v1995 = vunpack.c.l.b16 %v1803
        %v1996 = vunpack.c.l.b16 %v1804
        %v1997 = vunpack.c.l.b16 %v1805
        %v1998 = vunpack.c.l.b16 %v1806
        %v1999 = vunpack.c.l.b16 %v1807
        %v2000 = vunpack.c.l.b16 %v1808
        %v2001 = vunpack.c.l.b16 %v1809
        %v2002 = vunpack.c.l.b16 %v1810
        %v2003 = vunpack.c.l.b16 %v1811
        %v2004 = vunpack.c.l.b16 %v1812
        %v2005 = vunpack.c.l.b16 %v1813
        %v2006 = vunpack.c.l.b16 %v1814
        %v2007 = vunpack.c.l.b16 %v1815
        %v2008 = vunpack.c.l.b16 %v1816
        %v2009 = vunpack.c.l.b16 %v1817
        %v2010 = vunpack.c.l.b16 %v1818
        %v2011 = vunpack.c.l.b16 %v1819
        %v2012 = vunpack.c.l.b16 %v1820
        %v2013 = vunpack.c.l.b16 %v1821
        %v2014 = vunpack.c.l.b16 %v1822
        %v2015 = vunpack.c.l.b16 %v1823
        %v2016 = vunpack.c.l.b16 %v1824
        %v2017 = vunpack.c.l.b16 %v1825
        %v2018 = vunpack.c.l.b16 %v1826
        %v2019 = vunpack.c.l.b16 %v1827
        %v2020 = vunpack.c.l.b16 %v1828
        %v2021 = vunpack.c.l.b16 %v1829
        %v2022 = vunpack.c.l.b16 %v1830
        %v2023 = vunpack.c.l.b16 %v1831
        %v2024 = vunpack.c.l.b16 %v1832
        %v2025 = vunpack.c.l.b16 %v1833
        %v2026 = vunpack.c.l.b16 %v1834
        %v2027 = vunpack.c.l.b16 %v1835
        %v2028 = vunpack.c.l.b16 %v1836
        %v2029 = vunpack.c.l.b16 %v1837
        %v2030 = vunpack.c.l.b16 %v1838
        %v2031 = vunpack.c.l.b16 %v1839
        %v2032 = vunpack.c.l.b16 %v1840
        %v2033 = vunpack.c.l.b16 %v1841
        %v2034 = vunpack.c.l.b16 %v1842
        %v2035 = vunpack.c.l.b16 %v1843
        %v2036 = vunpack.c.l.b16 %v1844
        %v2037 = vunpack.c.l.b16 %v1845
        %v2038 = vunpack.c.l.b16 %v1846
        %v2039 = vunpack.c.l.b16 %v1847
        %v2040 = vunpack.c.l.b16 %v1848
        %v2041 = vunpack.c.l.b16 %v1849
        %v2042 = vunpack.c.l.b16 %v1850
        %v2043 = vunpack.c.l.b16 %v1851
        %v2044 = vunpack.c.l.b16 %v1852
        %v2045 = vpack.c.b16 %v1950, %v1949
        %v2046 = vpack.c.b16 %v1952, %v1951
        %v2047 = vpack.c.b16 %v1954, %v1953
        %v2048 = vpack.c.b16 %v1956, %v1955
        %v2049 = vpack.c.b16 %v1958, %v1957
        %v2050 = vpack.c.b16 %v1960, %v1959
        %v2051 = vpack.c.b16 %v1962, %v1961
        %v2052 = vpack.c.b16 %v1964, %v1963
        %v2053 = vpack.c.b16 %v1966, %v1965
        %v2054 = vpack.c.b16 %v1968, %v1967
        %v2055 = vpack.c.b16 %v1970, %v1969
        %v2056 = vpack.c.b16 %v1972, %v1971
        %v2057 = vpack.c.b16 %v1974, %v1973
        %v2058 = vpack.c.b16 %v1976, %v1975
        %v2059 = vpack.c.b16 %v1978, %v1977
        %v2060 = vpack.c.b16 %v1980, %v1979
        %v2061 = vpack.c.b16 %v1982, %v1981
        %v2062 = vpack.c.b16 %v1984, %v1983
        %v2063 = vpack.c.b16 %v1986, %v1985
        %v2064 = vpack.c.b16 %v1988, %v1987
        %v2065 = vpack.c.b16 %v1990, %v1989
        %v2066 = vpack.c.b16 %v1992, %v1991
        %v2067 = vpack.c.b16 %v1994, %v1993
        %v2068 = vpack.c.b16 %v1996, %v1995
        %v2069 = vpack.c.b16 %v1998, %v1997
        %v2070 = vpack.c.b16 %v2000, %v1999
        %v2071 = vpack.c.b16 %v2002, %v2001
        %v2072 = vpack.c.b16 %v2004, %v2003
        %v2073 = vpack.c.b16 %v2006, %v2005
        %v2074 = vpack.c.b16 %v2008, %v2007
        %v2075 = vpack.c.b16 %v2010, %v2009
        %v2076 = vpack.c.b16 %v2012, %v2011
        %v2077 = vpack.c.b16 %v2014, %v2013
        %v2078 = vpack.c.b16 %v2016, %v2015
        %v2079 = vpack.c.b16 %v2018, %v2017
        %v2080 = vpack.c.b16 %v2020, %v2019
        %v2081 = vpack.c.b16 %v2022, %v2021
        %v2082 = vpack.c.b16 %v2024, %v2023
        %v2083 = vpack.c.b16 %v2026, %v2025
        %v2084 = vpack.c.b16 %v2028, %v2027
        %v2085 = vpack.c.b16 %v2030, %v2029
        %v2086 = vpack.c.b16 %v2032, %v2031
        %v2087 = vpack.c.b16 %v2034, %v2033
        %v2088 = vpack.c.b16 %v2036, %v2035
        %v2089 = vpack.c.b16 %v2038, %v2037
        %v2090 = vpack.c.b16 %v2040, %v2039
        %v2091 = vpack.c.b16 %v2042, %v2041
        %v2092 = vpack.c.b16 %v2044, %v2043
        %2141 = vmatprep.subr.bf16.mxu0 0
        %2142 = vmatpush1.bf16.msra.mxu0 %v2045
        %2143 = vmatprep.subr.bf16.mxu0 0
        %2144 = vmatpush1.bf16.msra.mxu0 %v2046
        %2145 = vmatprep.subr.bf16.mxu0 0
        %2146 = vmatpush1.bf16.msra.mxu0 %v2047
        %2147 = vmatprep.subr.bf16.mxu0 0
        %2148 = vmatpush1.bf16.msra.mxu0 %v2048
        %2149 = vmatprep.subr.bf16.mxu0 0
        %2150 = vmatpush1.bf16.msra.mxu0 %v2049
        %2151 = vmatprep.subr.bf16.mxu0 0
        %2152 = vmatpush1.bf16.msra.mxu0 %v2050
        %2153 = vmatprep.subr.bf16.mxu0 0
        %2154 = vmatpush1.bf16.msra.mxu0 %v2051
        %2155 = vmatprep.subr.bf16.mxu0 0
        %2156 = vmatpush1.bf16.msra.mxu0 %v2052
        %2157 = vmatprep.subr.bf16.mxu0 0
        %2158 = vmatpush1.bf16.msra.mxu0 %v2053
        %2159 = vmatprep.subr.bf16.mxu0 0
        %2160 = vmatpush1.bf16.msra.mxu0 %v2054
        %2161 = vmatprep.subr.bf16.mxu0 0
        %2162 = vmatpush1.bf16.msra.mxu0 %v2055
        %2163 = vmatprep.subr.bf16.mxu0 0
        %2164 = vmatpush1.bf16.msra.mxu0 %v2056
        %2165 = vmatprep.subr.bf16.mxu0 0
        %2166 = vmatpush1.bf16.msra.mxu0 %v2057
        %2167 = vmatprep.subr.bf16.mxu0 0
        %2168 = vmatpush1.bf16.msra.mxu0 %v2058
        %2169 = vmatprep.subr.bf16.mxu0 0
        %2170 = vmatpush1.bf16.msra.mxu0 %v2059
        %2171 = vmatprep.subr.bf16.mxu0 0
        %2172 = vmatpush1.bf16.msra.mxu0 %v2060
        %2173 = vmatprep.mubr.bf16.mxu0 %v1710
        %2174 = vmatmul.mubr.bf16.gmra.mrb[0].mxu0 %v1709
        %v2175 = vpop.f32.mrb[0].mxu0
        %v2176 = vadd.f32 0.0, %v2175
        %v2177 = vpop.f32.mrb[0].mxu0
        %v2178 = vpop.f32.mrb[0].mxu0
        %v2179 = vadd.f32 0.0, %v2178
        %v2180 = vpop.f32.mrb[0].mxu0
        %2181 = vmatprep.mubr.bf16.mxu0 %v1716
        %2182 = vmatmul.mubr.bf16.gmra.mrb[0].mxu0 %v1715
        %v2183 = vpop.f32.mrb[0].mxu0
        %v2184 = vadd.f32 0.0, %v2183
        %v2185 = vpop.f32.mrb[0].mxu0
        %v2186 = vpop.f32.mrb[0].mxu0
        %v2187 = vadd.f32 0.0, %v2186
        %v2188 = vpop.f32.mrb[0].mxu0
        %2189 = vmatprep.mubr.bf16.mxu0 %v1722
        %2190 = vmatmul.mubr.bf16.gmra.mrb[0].mxu0 %v1721
        %v2191 = vpop.f32.mrb[0].mxu0
        %v2192 = vadd.f32 0.0, %v2191
        %v2193 = vpop.f32.mrb[0].mxu0
        %v2194 = vpop.f32.mrb[0].mxu0
        %v2195 = vadd.f32 0.0, %v2194
        %v2196 = vpop.f32.mrb[0].mxu0
        %2197 = vmatprep.mubr.bf16.mxu0 %v1728
        %2198 = vmatmul.mubr.bf16.gmra.mrb[0].mxu0 %v1727
        %v2199 = vpop.f32.mrb[0].mxu0
        %v2200 = vadd.f32 0.0, %v2199
        %v2201 = vpop.f32.mrb[0].mxu0
        %v2202 = vpop.f32.mrb[0].mxu0
        %v2203 = vadd.f32 0.0, %v2202
        %v2204 = vpop.f32.mrb[0].mxu0
        %2205 = vmatprep.mubr.bf16.mxu0 %v1734
        %2206 = vmatmul.mubr.bf16.gmra.mrb[0].mxu0 %v1733
        %v2207 = vpop.f32.mrb[0].mxu0
        %v2208 = vadd.f32 0.0, %v2207
        %v2209 = vpop.f32.mrb[0].mxu0
        %v2210 = vpop.f32.mrb[0].mxu0
        %v2211 = vadd.f32 0.0, %v2210
        %v2212 = vpop.f32.mrb[0].mxu0
        %2213 = vmatprep.mubr.bf16.mxu0 %v1740
        %2214 = vmatmul.mubr.bf16.gmra.mrb[0].mxu0 %v1739
        %v2215 = vpop.f32.mrb[0].mxu0
        %v2216 = vadd.f32 0.0, %v2215
        %v2217 = vpop.f32.mrb[0].mxu0
        %v2218 = vpop.f32.mrb[0].mxu0
        %v2219 = vadd.f32 0.0, %v2218
        %v2220 = vpop.f32.mrb[0].mxu0
        %2221 = vmatprep.mubr.bf16.mxu0 %v1746
        %2222 = vmatmul.mubr.bf16.gmra.mrb[0].mxu0 %v1745
        %v2223 = vpop.f32.mrb[0].mxu0
        %v2224 = vadd.f32 0.0, %v2223
        %v2225 = vpop.f32.mrb[0].mxu0
        %v2226 = vpop.f32.mrb[0].mxu0
        %v2227 = vadd.f32 0.0, %v2226
        %v2228 = vpop.f32.mrb[0].mxu0
        %2229 = vmatprep.mubr.bf16.mxu0 %v1752
        %2230 = vmatmul.mubr.bf16.gmra.mrb[0].mxu0 %v1751
        %v2231 = vpop.f32.mrb[0].mxu0
        %v2232 = vadd.f32 0.0, %v2231
        %v2233 = vpop.f32.mrb[0].mxu0
        %v2234 = vpop.f32.mrb[0].mxu0
        %v2235 = vadd.f32 0.0, %v2234
        %v2236 = vpop.f32.mrb[0].mxu0
        %2237 = vdwg.mxu0
        %2238 = vmatprep.subr.bf16.mxu0 0
        %2239 = vmatpush1.bf16.msra.mxu0 %v2061
        %2240 = vmatprep.subr.bf16.mxu0 0
        %2241 = vmatpush1.bf16.msra.mxu0 %v2062
        %2242 = vmatprep.subr.bf16.mxu0 0
        %2243 = vmatpush1.bf16.msra.mxu0 %v2063
        %2244 = vmatprep.subr.bf16.mxu0 0
        %2245 = vmatpush1.bf16.msra.mxu0 %v2064
        %2246 = vmatprep.subr.bf16.mxu0 0
        %2247 = vmatpush1.bf16.msra.mxu0 %v2065
        %2248 = vmatprep.subr.bf16.mxu0 0
        %2249 = vmatpush1.bf16.msra.mxu0 %v2066
        %2250 = vmatprep.subr.bf16.mxu0 0
        %2251 = vmatpush1.bf16.msra.mxu0 %v2067
        %2252 = vmatprep.subr.bf16.mxu0 0
        %2253 = vmatpush1.bf16.msra.mxu0 %v2068
        %2254 = vmatprep.subr.bf16.mxu0 0
        %2255 = vmatpush1.bf16.msra.mxu0 %v2069
        %2256 = vmatprep.subr.bf16.mxu0 0
        %2257 = vmatpush1.bf16.msra.mxu0 %v2070
        %2258 = vmatprep.subr.bf16.mxu0 0
        %2259 = vmatpush1.bf16.msra.mxu0 %v2071
        %2260 = vmatprep.subr.bf16.mxu0 0
        %2261 = vmatpush1.bf16.msra.mxu0 %v2072
        %2262 = vmatprep.subr.bf16.mxu0 0
        %2263 = vmatpush1.bf16.msra.mxu0 %v2073
        %2264 = vmatprep.subr.bf16.mxu0 0
        %2265 = vmatpush1.bf16.msra.mxu0 %v2074
        %2266 = vmatprep.subr.bf16.mxu0 0
        %2267 = vmatpush1.bf16.msra.mxu0 %v2075
        %2268 = vmatprep.subr.bf16.mxu0 0
        %2269 = vmatpush1.bf16.msra.mxu0 %v2076
        %2270 = vmatprep.mubr.bf16.mxu0 %v1712
        %2271 = vmatmul.mubr.bf16.gmra.mrb[0].mxu0 %v1711
        %v2272 = vpop.f32.mrb[0].mxu0
        %v2273 = vadd.f32 %v2176, %v2272
        %v2274 = vpop.f32.mrb[0].mxu0
        %v2275 = vpop.f32.mrb[0].mxu0
        %v2276 = vadd.f32 %v2179, %v2275
        %v2277 = vpop.f32.mrb[0].mxu0
        %2278 = vmatprep.mubr.bf16.mxu0 %v1718
        %2279 = vmatmul.mubr.bf16.gmra.mrb[0].mxu0 %v1717
        %v2280 = vpop.f32.mrb[0].mxu0
        %v2281 = vadd.f32 %v2184, %v2280
        %v2282 = vpop.f32.mrb[0].mxu0
        %v2283 = vpop.f32.mrb[0].mxu0
        %v2284 = vadd.f32 %v2187, %v2283
        %v2285 = vpop.f32.mrb[0].mxu0
        %2286 = vmatprep.mubr.bf16.mxu0 %v1724
        %2287 = vmatmul.mubr.bf16.gmra.mrb[0].mxu0 %v1723
        %v2288 = vpop.f32.mrb[0].mxu0
        %v2289 = vadd.f32 %v2192, %v2288
        %v2290 = vpop.f32.mrb[0].mxu0
        %v2291 = vpop.f32.mrb[0].mxu0
        %v2292 = vadd.f32 %v2195, %v2291
        %v2293 = vpop.f32.mrb[0].mxu0
        %2294 = vmatprep.mubr.bf16.mxu0 %v1730
        %2295 = vmatmul.mubr.bf16.gmra.mrb[0].mxu0 %v1729
        %v2296 = vpop.f32.mrb[0].mxu0
        %v2297 = vadd.f32 %v2200, %v2296
        %v2298 = vpop.f32.mrb[0].mxu0
        %v2299 = vpop.f32.mrb[0].mxu0
        %v2300 = vadd.f32 %v2203, %v2299
        %v2301 = vpop.f32.mrb[0].mxu0
        %2302 = vmatprep.mubr.bf16.mxu0 %v1736
        %2303 = vmatmul.mubr.bf16.gmra.mrb[0].mxu0 %v1735
        %v2304 = vpop.f32.mrb[0].mxu0
        %v2305 = vadd.f32 %v2208, %v2304
        %v2306 = vpop.f32.mrb[0].mxu0
        %v2307 = vpop.f32.mrb[0].mxu0
        %v2308 = vadd.f32 %v2211, %v2307
        %v2309 = vpop.f32.mrb[0].mxu0
        %2310 = vmatprep.mubr.bf16.mxu0 %v1742
        %2311 = vmatmul.mubr.bf16.gmra.mrb[0].mxu0 %v1741
        %v2312 = vpop.f32.mrb[0].mxu0
        %v2313 = vadd.f32 %v2216, %v2312
        %v2314 = vpop.f32.mrb[0].mxu0
        %v2315 = vpop.f32.mrb[0].mxu0
        %v2316 = vadd.f32 %v2219, %v2315
        %v2317 = vpop.f32.mrb[0].mxu0
        %2318 = vmatprep.mubr.bf16.mxu0 %v1748
        %2319 = vmatmul.mubr.bf16.gmra.mrb[0].mxu0 %v1747
        %v2320 = vpop.f32.mrb[0].mxu0
        %v2321 = vadd.f32 %v2224, %v2320
        %v2322 = vpop.f32.mrb[0].mxu0
        %v2323 = vpop.f32.mrb[0].mxu0
        %v2324 = vadd.f32 %v2227, %v2323
        %v2325 = vpop.f32.mrb[0].mxu0
        %2326 = vmatprep.mubr.bf16.mxu0 %v1754
        %2327 = vmatmul.mubr.bf16.gmra.mrb[0].mxu0 %v1753
        %v2328 = vpop.f32.mrb[0].mxu0
        %v2329 = vadd.f32 %v2232, %v2328
        %v2330 = vpop.f32.mrb[0].mxu0
        %v2331 = vpop.f32.mrb[0].mxu0
        %v2332 = vadd.f32 %v2235, %v2331
        %v2333 = vpop.f32.mrb[0].mxu0
        %2334 = vdwg.mxu0
        %2335 = vmatprep.subr.bf16.mxu0 0
        %2336 = vmatpush1.bf16.msra.mxu0 %v2077
        %2337 = vmatprep.subr.bf16.mxu0 0
        %2338 = vmatpush1.bf16.msra.mxu0 %v2078
        %2339 = vmatprep.subr.bf16.mxu0 0
        %2340 = vmatpush1.bf16.msra.mxu0 %v2079
        %2341 = vmatprep.subr.bf16.mxu0 0
        %2342 = vmatpush1.bf16.msra.mxu0 %v2080
        %2343 = vmatprep.subr.bf16.mxu0 0
        %2344 = vmatpush1.bf16.msra.mxu0 %v2081
        %2345 = vmatprep.subr.bf16.mxu0 0
        %2346 = vmatpush1.bf16.msra.mxu0 %v2082
        %2347 = vmatprep.subr.bf16.mxu0 0
        %2348 = vmatpush1.bf16.msra.mxu0 %v2083
        %2349 = vmatprep.subr.bf16.mxu0 0
        %2350 = vmatpush1.bf16.msra.mxu0 %v2084
        %2351 = vmatprep.subr.bf16.mxu0 0
        %2352 = vmatpush1.bf16.msra.mxu0 %v2085
        %2353 = vmatprep.subr.bf16.mxu0 0
        %2354 = vmatpush1.bf16.msra.mxu0 %v2086
        %2355 = vmatprep.subr.bf16.mxu0 0
        %2356 = vmatpush1.bf16.msra.mxu0 %v2087
        %2357 = vmatprep.subr.bf16.mxu0 0
        %2358 = vmatpush1.bf16.msra.mxu0 %v2088
        %2359 = vmatprep.subr.bf16.mxu0 0
        %2360 = vmatpush1.bf16.msra.mxu0 %v2089
        %2361 = vmatprep.subr.bf16.mxu0 0
        %2362 = vmatpush1.bf16.msra.mxu0 %v2090
        %2363 = vmatprep.subr.bf16.mxu0 0
        %2364 = vmatpush1.bf16.msra.mxu0 %v2091
        %2365 = vmatprep.subr.bf16.mxu0 0
        %2366 = vmatpush1.bf16.msra.mxu0 %v2092
        %2367 = vmatprep.mubr.bf16.mxu0 %v1714
        %2368 = vmatmul.mubr.bf16.gmra.mrb[0].mxu0 %v1713
        %v2369 = vpop.f32.mrb[0].mxu0
        %v2370 = vadd.f32 %v2273, %v2369
        %v2371 = vpop.f32.mrb[0].mxu0
        %v2372 = vpop.f32.mrb[0].mxu0
        %v2373 = vadd.f32 %v2276, %v2372
        %v2374 = vpop.f32.mrb[0].mxu0
        %2375 = vmatprep.mubr.bf16.mxu0 %v1720
        %2376 = vmatmul.mubr.bf16.gmra.mrb[0].mxu0 %v1719
        %v2377 = vpop.f32.mrb[0].mxu0
        %v2378 = vadd.f32 %v2281, %v2377
        %v2379 = vpop.f32.mrb[0].mxu0
        %v2380 = vpop.f32.mrb[0].mxu0
        %v2381 = vadd.f32 %v2284, %v2380
        %v2382 = vpop.f32.mrb[0].mxu0
        %2383 = vmatprep.mubr.bf16.mxu0 %v1726
        %2384 = vmatmul.mubr.bf16.gmra.mrb[0].mxu0 %v1725
        %v2385 = vpop.f32.mrb[0].mxu0
        %v2386 = vadd.f32 %v2289, %v2385
        %v2387 = vpop.f32.mrb[0].mxu0
        %v2388 = vpop.f32.mrb[0].mxu0
        %v2389 = vadd.f32 %v2292, %v2388
        %v2390 = vpop.f32.mrb[0].mxu0
        %2391 = vmatprep.mubr.bf16.mxu0 %v1732
        %2392 = vmatmul.mubr.bf16.gmra.mrb[0].mxu0 %v1731
        %v2393 = vpop.f32.mrb[0].mxu0
        %v2394 = vadd.f32 %v2297, %v2393
        %v2395 = vpop.f32.mrb[0].mxu0
        %v2396 = vpop.f32.mrb[0].mxu0
        %v2397 = vadd.f32 %v2300, %v2396
        %v2398 = vpop.f32.mrb[0].mxu0
        %2399 = vmatprep.mubr.bf16.mxu0 %v1738
        %2400 = vmatmul.mubr.bf16.gmra.mrb[0].mxu0 %v1737
        %v2401 = vpop.f32.mrb[0].mxu0
        %v2402 = vadd.f32 %v2305, %v2401
        %v2403 = vpop.f32.mrb[0].mxu0
        %v2404 = vpop.f32.mrb[0].mxu0
        %v2405 = vadd.f32 %v2308, %v2404
        %v2406 = vpop.f32.mrb[0].mxu0
        %2407 = vmatprep.mubr.bf16.mxu0 %v1744
        %2408 = vmatmul.mubr.bf16.gmra.mrb[0].mxu0 %v1743
        %v2409 = vpop.f32.mrb[0].mxu0
        %v2410 = vadd.f32 %v2313, %v2409
        %v2411 = vpop.f32.mrb[0].mxu0
        %v2412 = vpop.f32.mrb[0].mxu0
        %v2413 = vadd.f32 %v2316, %v2412
        %v2414 = vpop.f32.mrb[0].mxu0
        %2415 = vmatprep.mubr.bf16.mxu0 %v1750
        %2416 = vmatmul.mubr.bf16.gmra.mrb[0].mxu0 %v1749
        %v2417 = vpop.f32.mrb[0].mxu0
        %v2418 = vadd.f32 %v2321, %v2417
        %v2419 = vpop.f32.mrb[0].mxu0
        %v2420 = vpop.f32.mrb[0].mxu0
        %v2421 = vadd.f32 %v2324, %v2420
        %v2422 = vpop.f32.mrb[0].mxu0
        %2423 = vmatprep.mubr.bf16.mxu0 %v1756
        %2424 = vmatmul.mubr.bf16.gmra.mrb[0].mxu0 %v1755
        %v2425 = vpop.f32.mrb[0].mxu0
        %v2426 = vadd.f32 %v2329, %v2425
        %v2427 = vpop.f32.mrb[0].mxu0
        %v2428 = vpop.f32.mrb[0].mxu0
        %v2429 = vadd.f32 %v2332, %v2428
        %v2430 = vpop.f32.mrb[0].mxu0
        %2431 = vdwg.mxu0
        %v2432 = vmul.f32 %v2370, %v2370
        %v2433 = vmul.f32 %v2373, %v2373
        %v2434 = vmul.f32 %v2378, %v2378
        %v2435 = vmul.f32 %v2381, %v2381
        %v2436 = vmul.f32 %v2386, %v2386
        %v2437 = vmul.f32 %v2389, %v2389
        %v2438 = vmul.f32 %v2394, %v2394
        %v2439 = vmul.f32 %v2397, %v2397
        %v2440 = vmul.f32 %v2402, %v2402
        %v2441 = vmul.f32 %v2405, %v2405
        %v2442 = vmul.f32 %v2410, %v2410
        %v2443 = vmul.f32 %v2413, %v2413
        %v2444 = vmul.f32 %v2418, %v2418
        %v2445 = vmul.f32 %v2421, %v2421
        %v2446 = vmul.f32 %v2426, %v2426
        %v2447 = vmul.f32 %v2429, %v2429
        %2448 = vadd.xlane.f32.xlu0 %v2432
        %v2449 = vpop.xlane.xlu0 %2448
        %2450 = vadd.xlane.f32.xlu0 %v2433
        %v2451 = vpop.xlane.xlu0 %2450
        %2452 = vadd.xlane.f32.xlu0 %v2434
        %v2453 = vpop.xlane.xlu0 %2452
        %2454 = vadd.xlane.f32.xlu0 %v2435
        %v2455 = vpop.xlane.xlu0 %2454
        %2456 = vadd.xlane.f32.xlu0 %v2436
        %v2457 = vpop.xlane.xlu0 %2456
        %2458 = vadd.xlane.f32.xlu0 %v2437
        %v2459 = vpop.xlane.xlu0 %2458
        %2460 = vadd.xlane.f32.xlu0 %v2438
        %v2461 = vpop.xlane.xlu0 %2460
        %2462 = vadd.xlane.f32.xlu0 %v2439
        %v2463 = vpop.xlane.xlu0 %2462
        %2464 = vadd.xlane.f32.xlu0 %v2440
        %v2465 = vpop.xlane.xlu0 %2464
        %2466 = vadd.xlane.f32.xlu0 %v2441
        %v2467 = vpop.xlane.xlu0 %2466
        %2468 = vadd.xlane.f32.xlu0 %v2442
        %v2469 = vpop.xlane.xlu0 %2468
        %2470 = vadd.xlane.f32.xlu0 %v2443
        %v2471 = vpop.xlane.xlu0 %2470
        %2472 = vadd.xlane.f32.xlu0 %v2444
        %v2473 = vpop.xlane.xlu0 %2472
        %2474 = vadd.xlane.f32.xlu0 %v2445
        %v2475 = vpop.xlane.xlu0 %2474
        %2476 = vadd.xlane.f32.xlu0 %v2446
        %v2477 = vpop.xlane.xlu0 %2476
        %2478 = vadd.xlane.f32.xlu0 %v2447
        %v2479 = vpop.xlane.xlu0 %2478
        %v2480 = vmul.f32 %v2449, 0.1
        %v2481 = vmul.f32 %v2451, 0.1
        %v2482 = vmul.f32 %v2453, 0.1
        %v2483 = vmul.f32 %v2455, 0.1
        %v2484 = vmul.f32 %v2457, 0.1
        %v2485 = vmul.f32 %v2459, 0.1
        %v2486 = vmul.f32 %v2461, 0.1
        %v2487 = vmul.f32 %v2463, 0.1
        %v2488 = vmul.f32 %v2465, 0.1
        %v2489 = vmul.f32 %v2467, 0.1
        %v2490 = vmul.f32 %v2469, 0.1
        %v2491 = vmul.f32 %v2471, 0.1
        %v2492 = vmul.f32 %v2473, 0.1
        %v2493 = vmul.f32 %v2475, 0.1
        %v2494 = vmul.f32 %v2477, 0.1
        %v2495 = vmul.f32 %v2479, 0.1
        %v2512 = vlaneseq
        %v2513 = vshrl.u32 %v2512, 7
        %v2514 = vsub.s32 %v1597, %v2513
        %v2515 = vrot.slane %v2480, %v2514
        %v2516 = vlaneseq
        %v2517 = vshrl.u32 %v2516, 7
        %v2518 = vsub.s32 %v1602, %v2517
        %v2519 = vrot.slane %v2481, %v2518
        %v2520 = vsel %vm1607, %v2519, %v2515
        %v2521 = vlaneseq
        %v2522 = vshrl.u32 %v2521, 7
        %v2523 = vsub.s32 %v1609, %v2522
        %v2524 = vrot.slane %v2482, %v2523
        %v2525 = vsel %vm1614, %v2524, %v2520
        %v2526 = vlaneseq
        %v2527 = vshrl.u32 %v2526, 7
        %v2528 = vsub.s32 %v1616, %v2527
        %v2529 = vrot.slane %v2483, %v2528
        %v2530 = vsel %vm1621, %v2529, %v2525
        %v2531 = vlaneseq
        %v2532 = vshrl.u32 %v2531, 7
        %v2533 = vsub.s32 %v1623, %v2532
        %v2534 = vrot.slane %v2484, %v2533
        %v2535 = vsel %vm1628, %v2534, %v2530
        %v2536 = vlaneseq
        %v2537 = vshrl.u32 %v2536, 7
        %v2538 = vsub.s32 %v1630, %v2537
        %v2539 = vrot.slane %v2485, %v2538
        %v2540 = vsel %vm1635, %v2539, %v2535
        %v2541 = vlaneseq
        %v2542 = vshrl.u32 %v2541, 7
        %v2543 = vsub.s32 %v1637, %v2542
        %v2544 = vrot.slane %v2486, %v2543
        %v2545 = vsel %vm1642, %v2544, %v2540
        %v2546 = vlaneseq
        %v2547 = vshrl.u32 %v2546, 7
        %v2548 = vsub.s32 %v1644, %v2547
        %v2549 = vrot.slane %v2487, %v2548
        %v2550 = vsel %vm1649, %v2549, %v2545
        %v2551 = vlaneseq
        %v2552 = vshrl.u32 %v2551, 7
        %v2553 = vsub.s32 %v1651, %v2552
        %v2554 = vrot.slane %v2488, %v2553
        %v2555 = vsel %vm1656, %v2554, %v2550
        %v2556 = vlaneseq
        %v2557 = vshrl.u32 %v2556, 7
        %v2558 = vsub.s32 %v1658, %v2557
        %v2559 = vrot.slane %v2489, %v2558
        %v2560 = vsel %vm1663, %v2559, %v2555
        %v2561 = vlaneseq
        %v2562 = vshrl.u32 %v2561, 7
        %v2563 = vsub.s32 %v1665, %v2562
        %v2564 = vrot.slane %v2490, %v2563
        %v2565 = vsel %vm1670, %v2564, %v2560
        %v2566 = vlaneseq
        %v2567 = vshrl.u32 %v2566, 7
        %v2568 = vsub.s32 %v1672, %v2567
        %v2569 = vrot.slane %v2491, %v2568
        %v2570 = vsel %vm1677, %v2569, %v2565
        %v2571 = vlaneseq
        %v2572 = vshrl.u32 %v2571, 7
        %v2573 = vsub.s32 %v1679, %v2572
        %v2574 = vrot.slane %v2492, %v2573
        %v2575 = vsel %vm1684, %v2574, %v2570
        %v2576 = vlaneseq
        %v2577 = vshrl.u32 %v2576, 7
        %v2578 = vsub.s32 %v1686, %v2577
        %v2579 = vrot.slane %v2493, %v2578
        %v2580 = vsel %vm1691, %v2579, %v2575
        %v2581 = vlaneseq
        %v2582 = vshrl.u32 %v2581, 7
        %v2583 = vsub.s32 %v1693, %v2582
        %v2584 = vrot.slane %v2494, %v2583
        %v2585 = vsel %vm1698, %v2584, %v2580
        %v2586 = vlaneseq
        %v2587 = vshrl.u32 %v2586, 7
        %v2588 = vsub.s32 %v1700, %v2587
        %v2589 = vrot.slane %v2495, %v2588
        %v2590 = vsel %vm1705, %v2589, %v2585
        %2592 = vst [vmem:[%s266] sm:$0x1] %v2590
        %s2593 = sand.u32 %s147, 1
        %s2594 = scalar_lea.sflag [#allocation3], %s2593
        %s2595 = sand.u32 %s147, 1
        %s2596 = scalar_lea.vmem [#allocation2], %s2595
        %s2597 = sand.u32 %s173, 1
        %s2598 = scalar_lea.sflag [#allocation5], %s2597
        %s2599 = sand.u32 %s173, 1
        %s2600 = scalar_lea.vmem [#allocation4], %s2599
        // Predicated region
        $region41: #{loss_forward.1} parent=39 // pred_check
          %p2601 = pneg %p157
        $region42: #{loss_forward.1} parent=39 // pred_check_branch
          %2603 = sbr.rel (%p2601) target = $region44
        $region43: #{loss_forward.1} parent=39 // pred_region
          %s2605 = ssub.s32 16, 16
          %2606 = vsyncadd %s2594, %s2605
          %s2607 = smul.addr %s24, 16
          %s2608 = scalar_lea.hbm %s5, %s2607
          %s2610 = sshll.u32 %s2596, 4
          %s2611 = int_to_ptr.vmem [resolvable:$true] %s2610
          %2613 = dma.vmem_to_hbm [thread:$0]  %s2611, 16, %s2608, %s2594
        $region44: #{loss_forward.1} parent=39 // pred_fallthru
          _
        // Predicated region
        $region45: #{loss_forward.1} parent=39 // pred_check
          %p2614 = pneg %p183
        $region46: #{loss_forward.1} parent=39 // pred_check_branch
          %2616 = sbr.rel (%p2614) target = $region48
        $region47: #{loss_forward.1} parent=39 // pred_region
          %s2618 = ssub.s32 16, 16
          %2619 = vsyncadd %s2598, %s2618
          %s2620 = smul.addr %s24, 16
          %s2621 = scalar_lea.hbm %s6, %s2620
          %s2623 = sshll.u32 %s2600, 4
          %s2624 = int_to_ptr.vmem [resolvable:$true] %s2623
          %2626 = dma.vmem_to_hbm [thread:$0]  %s2624, 16, %s2621, %s2598
        $region48: #{loss_forward.1} parent=39 // pred_fallthru
          _
      $region40: #{loss_forward.1} parent=5 // pred_fallthru
        _
      %p2627 = scmp.le.s32.totalorder 2, %s19
      // Predicated region
      $region49: #{loss_forward.1} parent=5 // pred_check
        %p2628 = pneg %p2627
      $region50: #{loss_forward.1} parent=5 // pred_check_branch
        %2630 = sbr.rel (%p2628) target = $region52
      $region51: #{loss_forward.1} parent=5 // pred_region
        %s2631 = ssub.s32 %s19, 2
        // Predicated region
        $region53: #{loss_forward.1} parent=51 // pred_check
          %p2632 = pneg %p163
        $region54: #{loss_forward.1} parent=51 // pred_check_branch
          %2634 = sbr.rel (%p2632) target = $region56
        $region55: #{loss_forward.1} parent=51 // pred_region
          %s2635 = sand.u32 %s148, 1
          %s2636 = scalar_lea.sflag [#allocation3], %s2635
          %s2637 = sand.u32 %s148, 1
          %s2638 = scalar_lea.vmem [#allocation2], %s2637
          %2639 = dma.done %s2636, 16
        $region56: #{loss_forward.1} parent=51 // pred_fallthru
          _
        // Predicated region
        $region57: #{loss_forward.1} parent=51 // pred_check
          %p2640 = pneg %p189
        $region58: #{loss_forward.1} parent=51 // pred_check_branch
          %2642 = sbr.rel (%p2640) target = $region60
        $region59: #{loss_forward.1} parent=51 // pred_region
          %s2643 = sand.u32 %s174, 1
          %s2644 = scalar_lea.sflag [#allocation5], %s2643
          %s2645 = sand.u32 %s174, 1
          %s2646 = scalar_lea.vmem [#allocation4], %s2645
          %2647 = dma.done %s2644, 16
        $region60: #{loss_forward.1} parent=51 // pred_fallthru
          _
      $region52: #{loss_forward.1} parent=5 // pred_fallthru
        _
    $region6: #{loss_forward.1} parent=1 // loop_footer
      %s23 = sadd.s32 1, %s19
    $region7: #{loss_forward.1} parent=1 // loop_footer_branch
      %18 = sbr.rel target = $region3
    $region8: #{loss_forward.1} parent=1 // loop_exit
      _
    %2648 = vsyncpa [#allocation3], 1
    %s2649 = scalar_lea.sflag [#allocation3], 1
    %2650 = vsyncpa %s2649, 1
    %2651 = vsyncpa [#allocation5], 1
    %s2652 = scalar_lea.sflag [#allocation5], 1
    %2653 = vsyncpa %s2652, 1

</llo_original>
